<compile_context>
chip_gen: v5e
topology: v5e:2x2
jax: 0.10.0
libtpu: 0.0.40
codegen_flags: <defaults>
</compile_context>

<pallas_src>
import jax
import jax.numpy as jnp
from jax.experimental import pallas as pl
from jax.experimental.pallas import tpu as pltpu

# ---- FF hyper-parameters (compile-time constants) --------------------------
FF_LAYERS = 2
FF_LAYER_NORM = True
FF_ACTIVATION = "relu"          # {'relu', 'tanh'}
FF_RESIDUAL = False             # requires dim_hidden == dim_input if True
DROPOUT_RATE = 0.0              # p=0 -> dropout is the identity in forward
LN_EPS = 1e-5                   # nn.LayerNorm default eps
MATMUL_DTYPE = jnp.bfloat16     # MXU operand dtype (f32 accumulation)


# ---- Pallas kernel ---------------------------------------------------------
def ff_kernel(x_ref, *refs):
    """refs = [w_0, ..., w_{L-1}, w_out, b_packed, o_ref].

    LayerNorm gamma/beta are already folded into the weights/biases by
    prepare_ff_params(), so the kernel only normalizes (mean / rsqrt(var))
    before each matmul.  b_packed is (FF_LAYERS + 1, d_max) f32; row l holds
    the folded bias of layer l (zero-padded to d_max).
    """
    o_ref = refs[-1]
    b_ref = refs[-2]
    w_refs = refs[:-2]

    h = x_ref[...].astype(jnp.float32)       # (TILE_B, d_in) batch tile
    for l in range(FF_LAYERS):
        h_in = h
        if FF_LAYER_NORM:
            # Two-pass statistics in f32 (robust to large post-ReLU means).
            m = jnp.mean(h_in, axis=-1, keepdims=True)
            c = h_in - m
            var = jnp.mean(c * c, axis=-1, keepdims=True)
            h = c * jax.lax.rsqrt(var + LN_EPS)
        else:
            h = h_in
        w = w_refs[l][...]                    # bf16, (d_in_l, d_hidden)
        d = w.shape[1]
        b = b_ref[l:l + 1, :d]                # f32,  (1, d_hidden)
        h = jnp.dot(h.astype(w.dtype), w,
                    preferred_element_type=jnp.float32) + b
        if FF_ACTIVATION == "relu":
            h = jnp.maximum(h, 0.0)
        else:
            h = jnp.tanh(h)
        # dropout_rate == 0 -> identity (no-op)
        if FF_RESIDUAL:
            h = h_in + h

    w_out = w_refs[FF_LAYERS][...]            # bf16, (d_hidden, d_out)
    d_out = w_out.shape[1]
    b_out = b_ref[FF_LAYERS:FF_LAYERS + 1, :d_out]
    o_ref[...] = (jnp.dot(h.astype(w_out.dtype), w_out,
                          preferred_element_type=jnp.float32)
                  + b_out).astype(o_ref.dtype)


# ---- One-time parameter preparation (call at load time, not per step) ------
def prepare_ff_params(layer_params, w_out, b_out):
    """Fold the LayerNorm affine into the following Linear (exact algebra):
         (n * gamma + beta) @ W + b == n @ (gamma[:,None] * W) + (beta @ W + b)
    Cast weights to bf16 (MXU operands), keep biases in f32, and pack all
    biases into a single (FF_LAYERS + 1, d_max) array.
    """
    weights = []
    biases = []
    for (g, bt, w, b) in layer_params:
        if FF_LAYER_NORM:
            w_f = g.reshape(-1, 1) * w
            b_f = bt @ w + b
        else:
            w_f, b_f = w, b
        weights.append(jnp.asarray(w_f, MATMUL_DTYPE))
        biases.append(jnp.asarray(b_f, jnp.float32).reshape(-1))
    weights.append(jnp.asarray(w_out, MATMUL_DTYPE))
    biases.append(jnp.asarray(b_out, jnp.float32).reshape(-1))

    d_max = max(int(b.shape[0]) for b in biases)
    b_packed = jnp.zeros((len(biases), d_max), jnp.float32)
    for i, b in enumerate(biases):
        b_packed = b_packed.at[i, : b.shape[0]].set(b)
    return tuple(weights), b_packed


# ---- Wrapper ---------------------------------------------------------------
def _pick_tile_b(B):
    """Large batch tile (amortize grid-step overhead, fill MXU rows), but keep
    >= 2 grid steps when possible so v7x megacore can use both TensorCores."""
    if B <= 16:
        return B
    t = min(512, max(8, B // 2))
    t -= t % 8
    while t > 8 and B % t:
        t -= 8
    if t < 8 or B % t:
        return B
    return t


_SINGLE_BUFFER_PARAMS = None  # resolved lazily (True/False)


def ff_forward(x, weights, b_packed, *, tile_b=None, out_dtype=None):
    global _SINGLE_BUFFER_PARAMS
    B, d_in = x.shape
    d_out = weights[-1].shape[1]
    if out_dtype is None:
        out_dtype = x.dtype
    if tile_b is None:
        tile_b = _pick_tile_b(B)
    assert B % tile_b == 0, f"batch {B} must be a multiple of tile_b {tile_b}"

    grid = (B // tile_b,)
    x_spec = pl.BlockSpec((tile_b, d_in), lambda i: (i, 0))
    o_spec = pl.BlockSpec((tile_b, d_out), lambda i: (i, 0))

    # Advisory cost estimate for the XLA scheduler.
    flops = sum(2 * B * int(w.shape[0]) * int(w.shape[1]) for w in weights)
    param_bytes = (sum(int(w.size) * jnp.dtype(w.dtype).itemsize for w in weights)
                   + int(b_packed.size) * 4)
    stream_bytes = (B * d_in * jnp.dtype(x.dtype).itemsize
                    + B * d_out * jnp.dtype(out_dtype).itemsize)
    cost = pl.CostEstimate(flops=int(flops),
                           bytes_accessed=int(param_bytes + stream_bytes),
                           transcendentals=int(B * FF_LAYERS))

    tile_stream = 2 * tile_b * (d_in * jnp.dtype(x.dtype).itemsize
                                + d_out * jnp.dtype(out_dtype).itemsize)
    vmem_limit = int(min(64 << 20, max(16 << 20, 4 * (param_bytes + tile_stream))))

    def build(single_buffer):
        if single_buffer:
            # Constant index_map -> params DMA'd once; single-buffer them so
            # resident weights cost 1x (not 2x) VMEM (matters on v7x @ 64 MiB).
            param_specs = [pl.BlockSpec(p.shape, lambda i: (0, 0),
                                        pipeline_mode=pl.Buffered(1))
                           for p in list(weights) + [b_packed]]
        else:
            param_specs = [pl.BlockSpec(p.shape, lambda i: (0, 0))
                           for p in list(weights) + [b_packed]]
        return pl.pallas_call(
            ff_kernel,
            out_shape=jax.ShapeDtypeStruct((B, d_out), out_dtype),
            grid=grid,
            in_specs=[x_spec] + param_specs,
            out_specs=o_spec,
            compiler_params=pltpu.CompilerParams(
                dimension_semantics=("parallel",),
                vmem_limit_bytes=vmem_limit,
            ),
            cost_estimate=cost,
        )

    args = (x,) + tuple(weights) + (b_packed,)
    if _SINGLE_BUFFER_PARAMS is None:
        try:
            out = build(True)(*args)
            jax.block_until_ready(out)
            _SINGLE_BUFFER_PARAMS = True
            return out
        except Exception:
            _SINGLE_BUFFER_PARAMS = False
    if _SINGLE_BUFFER_PARAMS:
        return build(True)(*args)
    return build(False)(*args)


# ---- Pure-JAX reference (f32, matches PyTorch semantics) --------------------
def ff_ref(x, layer_params, w_out, b_out):
    h = x.astype(jnp.float32)
    for (g, bt, w, b) in layer_params:
        h_in = h
        y = h_in
        if FF_LAYER_NORM:
            mean = jnp.mean(y, axis=-1, keepdims=True)
            var = jnp.mean((y - mean) ** 2, axis=-1, keepdims=True)
            y = (y - mean) / jnp.sqrt(var + LN_EPS) * g + bt
        y = y @ w + b
        y = jnp.maximum(y, 0.0) if FF_ACTIVATION == "relu" else jnp.tanh(y)
        h = h_in + y if FF_RESIDUAL else y
    return h @ w_out + b_out


# ---- Main ------------------------------------------------------------------
if __name__ == "__main__":
    # Lane-dense feature dims (multiples of 128); small batch for the test.
    batch, dim_input, dim_hidden, dim_output = 64, 128, 128, 128

    key = jax.random.PRNGKey(0)
    keys = jax.random.split(key, 4 * FF_LAYERS + 3)

    layer_params = []
    in_dim = dim_input
    for l in range(FF_LAYERS):
        gamma = 1.0 + 0.1 * jax.random.normal(keys[4 * l], (1, in_dim), jnp.float32)
        beta = 0.1 * jax.random.normal(keys[4 * l + 1], (1, in_dim), jnp.float32)
        w = jax.random.normal(keys[4 * l + 2], (in_dim, dim_hidden),
                              jnp.float32) * 0.1
        b = jax.random.normal(keys[4 * l + 3], (1, dim_hidden),
                              jnp.float32) * 0.1
        layer_params.append((gamma, beta, w, b))
        in_dim = dim_hidden

    w_out = jax.random.normal(keys[-3], (in_dim, dim_output), jnp.float32) * 0.1
    b_out = jax.random.normal(keys[-2], (1, dim_output), jnp.float32) * 0.1

    x_f32 = jax.random.normal(keys[-1], (batch, dim_input), jnp.float32)
    # Activation streaming in bf16 (weights are VMEM-resident; x/out are the
    # only recurring HBM traffic). Caller is assumed to hold bf16 activations.
    x = x_f32.astype(jnp.bfloat16)

    # One-time parameter prep (folding / casting / packing) outside the hot path.
    weights, b_packed = prepare_ff_params(layer_params, w_out, b_out)

    out = ff_forward(x, weights, b_packed)        # tile_b auto -> 32 (2 steps)
    out = jax.block_until_ready(out)

    ref = ff_ref(x.astype(jnp.float32), layer_params, w_out, b_out)
    assert out.shape == (batch, dim_output)
    # bf16 MXU operands + bf16 I/O (f32 accumulation / LN math) vs f32 ref.
    out_f32 = out.astype(jnp.float32)
    max_err = jnp.max(jnp.abs(out_f32 - ref))
    assert jnp.allclose(out_f32, ref, atol=5e-2, rtol=5e-2), (
        f"max abs err = {max_err}")

    print("KERNEL_OK")
</pallas_src>

<mosaic_0001>
module attributes {stable_mosaic.version = 11 : i64} {
  func.func @ff_kernel(%arg0: i32, %arg1: memref<32x128xbf16, #tpu.memory_space<vmem>>, %arg2: memref<128x128xbf16, #tpu.memory_space<vmem>>, %arg3: memref<128x128xbf16, #tpu.memory_space<vmem>>, %arg4: memref<128x128xbf16, #tpu.memory_space<vmem>>, %arg5: memref<3x128xf32, #tpu.memory_space<vmem>>, %arg6: memref<32x128xbf16, #tpu.memory_space<vmem>>) attributes {dimension_semantics = [#tpu.dimension_semantics<parallel>], iteration_bounds = array<i64: 2>, scalar_prefetch = 0 : i64, scratch_operands = 0 : i64, tpu.core_type = #tpu.core_type<tc>, window_params = [{transform_indices = @transform_0, window_bounds = array<i64: 32, 128>}, {pipeline_mode = #tpu.pipeline_mode<synchronous>, transform_indices = @transform_1, window_bounds = array<i64: 128, 128>}, {pipeline_mode = #tpu.pipeline_mode<synchronous>, transform_indices = @transform_2, window_bounds = array<i64: 128, 128>}, {pipeline_mode = #tpu.pipeline_mode<synchronous>, transform_indices = @transform_3, window_bounds = array<i64: 128, 128>}, {pipeline_mode = #tpu.pipeline_mode<synchronous>, transform_indices = @transform_4, window_bounds = array<i64: 3, 128>}, {transform_indices = @transform_5, window_bounds = array<i64: 32, 128>}]} {
    %c0 = arith.constant 0 : index
    %c0_0 = arith.constant 0 : index
    %0 = vector.load %arg1[%c0, %c0_0] : memref<32x128xbf16, #tpu.memory_space<vmem>>, vector<32x128xbf16>
    %1 = arith.extf %0 : vector<32x128xbf16> to vector<32x128xf32>
    %cst = arith.constant dense<0.000000e+00> : vector<32xf32>
    %2 = vector.multi_reduction <add>, %1, %cst [1] : vector<32x128xf32> to vector<32xf32>
    %3 = vector.shape_cast %2 : vector<32xf32> to vector<32x1xf32>
    %cst_1 = arith.constant 1.280000e+02 : f32
    %4 = vector.broadcast %cst_1 : f32 to vector<32x1xf32>
    %5 = arith.divf %3, %4 : vector<32x1xf32>
    %6 = vector.broadcast %5 : vector<32x1xf32> to vector<32x128xf32>
    %7 = arith.subf %1, %6 : vector<32x128xf32>
    %8 = arith.mulf %7, %7 : vector<32x128xf32>
    %cst_2 = arith.constant dense<0.000000e+00> : vector<32xf32>
    %9 = vector.multi_reduction <add>, %8, %cst_2 [1] : vector<32x128xf32> to vector<32xf32>
    %10 = vector.shape_cast %9 : vector<32xf32> to vector<32x1xf32>
    %cst_3 = arith.constant 1.280000e+02 : f32
    %11 = vector.broadcast %cst_3 : f32 to vector<32x1xf32>
    %12 = arith.divf %10, %11 : vector<32x1xf32>
    %cst_4 = arith.constant 9.99999974E-6 : f32
    %13 = vector.broadcast %cst_4 : f32 to vector<32x1xf32>
    %14 = arith.addf %12, %13 : vector<32x1xf32>
    %15 = math.rsqrt %14 : vector<32x1xf32>
    %16 = vector.broadcast %15 : vector<32x1xf32> to vector<32x128xf32>
    %17 = arith.mulf %7, %16 : vector<32x128xf32>
    %c0_5 = arith.constant 0 : index
    %c0_6 = arith.constant 0 : index
    %18 = vector.load %arg2[%c0_5, %c0_6] : memref<128x128xbf16, #tpu.memory_space<vmem>>, vector<128x128xbf16>
    %c0_7 = arith.constant 0 : index
    %c0_8 = arith.constant 0 : index
    %19 = vector.load %arg5[%c0_7, %c0_8] : memref<3x128xf32, #tpu.memory_space<vmem>>, vector<1x128xf32>
    %20 = arith.truncf %17 : vector<32x128xf32> to vector<32x128xbf16>
    %cst_9 = arith.constant dense<0.000000e+00> : vector<32x128xf32>
    %21 = tpu.matmul %20, %18, %cst_9 {dimension_numbers = #tpu.dot_dimension_numbers<[1], [0], [0], [1], [0, 0, 1, 1], [], []>} : vector<32x128xbf16>, vector<128x128xbf16>, vector<32x128xf32> -> vector<32x128xf32>
    %22 = vector.broadcast %19 : vector<1x128xf32> to vector<32x128xf32>
    %23 = arith.addf %21, %22 : vector<32x128xf32>
    %cst_10 = arith.constant 0.000000e+00 : f32
    %24 = vector.broadcast %cst_10 : f32 to vector<32x128xf32>
    %25 = arith.maximumf %23, %24 : vector<32x128xf32>
    %cst_11 = arith.constant dense<0.000000e+00> : vector<32xf32>
    %26 = vector.multi_reduction <add>, %25, %cst_11 [1] : vector<32x128xf32> to vector<32xf32>
    %27 = vector.shape_cast %26 : vector<32xf32> to vector<32x1xf32>
    %cst_12 = arith.constant 1.280000e+02 : f32
    %28 = vector.broadcast %cst_12 : f32 to vector<32x1xf32>
    %29 = arith.divf %27, %28 : vector<32x1xf32>
    %30 = vector.broadcast %29 : vector<32x1xf32> to vector<32x128xf32>
    %31 = arith.subf %25, %30 : vector<32x128xf32>
    %32 = arith.mulf %31, %31 : vector<32x128xf32>
    %cst_13 = arith.constant dense<0.000000e+00> : vector<32xf32>
    %33 = vector.multi_reduction <add>, %32, %cst_13 [1] : vector<32x128xf32> to vector<32xf32>
    %34 = vector.shape_cast %33 : vector<32xf32> to vector<32x1xf32>
    %cst_14 = arith.constant 1.280000e+02 : f32
    %35 = vector.broadcast %cst_14 : f32 to vector<32x1xf32>
    %36 = arith.divf %34, %35 : vector<32x1xf32>
    %cst_15 = arith.constant 9.99999974E-6 : f32
    %37 = vector.broadcast %cst_15 : f32 to vector<32x1xf32>
    %38 = arith.addf %36, %37 : vector<32x1xf32>
    %39 = math.rsqrt %38 : vector<32x1xf32>
    %40 = vector.broadcast %39 : vector<32x1xf32> to vector<32x128xf32>
    %41 = arith.mulf %31, %40 : vector<32x128xf32>
    %c0_16 = arith.constant 0 : index
    %c0_17 = arith.constant 0 : index
    %42 = vector.load %arg3[%c0_16, %c0_17] : memref<128x128xbf16, #tpu.memory_space<vmem>>, vector<128x128xbf16>
    %c1 = arith.constant 1 : index
    %c0_18 = arith.constant 0 : index
    %43 = vector.load %arg5[%c1, %c0_18] : memref<3x128xf32, #tpu.memory_space<vmem>>, vector<1x128xf32>
    %44 = arith.truncf %41 : vector<32x128xf32> to vector<32x128xbf16>
    %cst_19 = arith.constant dense<0.000000e+00> : vector<32x128xf32>
    %45 = tpu.matmul %44, %42, %cst_19 {dimension_numbers = #tpu.dot_dimension_numbers<[1], [0], [0], [1], [0, 0, 1, 1], [], []>} : vector<32x128xbf16>, vector<128x128xbf16>, vector<32x128xf32> -> vector<32x128xf32>
    %46 = vector.broadcast %43 : vector<1x128xf32> to vector<32x128xf32>
    %47 = arith.addf %45, %46 : vector<32x128xf32>
    %cst_20 = arith.constant 0.000000e+00 : f32
    %48 = vector.broadcast %cst_20 : f32 to vector<32x128xf32>
    %49 = arith.maximumf %47, %48 : vector<32x128xf32>
    %c0_21 = arith.constant 0 : index
    %c0_22 = arith.constant 0 : index
    %50 = vector.load %arg4[%c0_21, %c0_22] : memref<128x128xbf16, #tpu.memory_space<vmem>>, vector<128x128xbf16>
    %c2 = arith.constant 2 : index
    %c0_23 = arith.constant 0 : index
    %51 = vector.load %arg5[%c2, %c0_23] : memref<3x128xf32, #tpu.memory_space<vmem>>, vector<1x128xf32>
    %52 = arith.truncf %49 : vector<32x128xf32> to vector<32x128xbf16>
    %cst_24 = arith.constant dense<0.000000e+00> : vector<32x128xf32>
    %53 = tpu.matmul %52, %50, %cst_24 {dimension_numbers = #tpu.dot_dimension_numbers<[1], [0], [0], [1], [0, 0, 1, 1], [], []>} : vector<32x128xbf16>, vector<128x128xbf16>, vector<32x128xf32> -> vector<32x128xf32>
    %54 = vector.broadcast %51 : vector<1x128xf32> to vector<32x128xf32>
    %55 = arith.addf %53, %54 : vector<32x128xf32>
    %56 = arith.truncf %55 : vector<32x128xf32> to vector<32x128xbf16>
    %c0_25 = arith.constant 0 : index
    %c0_26 = arith.constant 0 : index
    %57 = vector.load %arg6[%c0_25, %c0_26] : memref<32x128xbf16, #tpu.memory_space<vmem>>, vector<32x128xbf16>
    tpu.vector_store %arg6[%c0_25, %c0_26], %56 {strides = array<i32>} : memref<32x128xbf16, #tpu.memory_space<vmem>>, vector<32x128xbf16>,
    return
  }
  func.func @transform_0(%arg0: i32) -> (i32, i32) {
    %c0_i32 = arith.constant 0 : i32
    %c0_i32_0 = arith.constant 0 : i32
    return %arg0, %c0_i32 : i32, i32
  }
  func.func @transform_1(%arg0: i32) -> (i32, i32) {
    %c0_i32 = arith.constant 0 : i32
    %c0_i32_0 = arith.constant 0 : i32
    %c0_i32_1 = arith.constant 0 : i32
    return %c0_i32, %c0_i32_0 : i32, i32
  }
  func.func @transform_2(%arg0: i32) -> (i32, i32) {
    %c0_i32 = arith.constant 0 : i32
    %c0_i32_0 = arith.constant 0 : i32
    %c0_i32_1 = arith.constant 0 : i32
    return %c0_i32, %c0_i32_0 : i32, i32
  }
  func.func @transform_3(%arg0: i32) -> (i32, i32) {
    %c0_i32 = arith.constant 0 : i32
    %c0_i32_0 = arith.constant 0 : i32
    %c0_i32_1 = arith.constant 0 : i32
    return %c0_i32, %c0_i32_0 : i32, i32
  }
  func.func @transform_4(%arg0: i32) -> (i32, i32) {
    %c0_i32 = arith.constant 0 : i32
    %c0_i32_0 = arith.constant 0 : i32
    %c0_i32_1 = arith.constant 0 : i32
    return %c0_i32, %c0_i32_0 : i32, i32
  }
  func.func @transform_5(%arg0: i32) -> (i32, i32) {
    %c0_i32 = arith.constant 0 : i32
    %c0_i32_0 = arith.constant 0 : i32
    return %arg0, %c0_i32 : i32, i32
  }
}

module attributes {stable_mosaic.version = 11 : i64} {
  func.func @ff_kernel(%arg0: i32, %arg1: memref<32x128xbf16, #tpu.memory_space<vmem>>, %arg2: memref<128x128xbf16, #tpu.memory_space<vmem>>, %arg3: memref<128x128xbf16, #tpu.memory_space<vmem>>, %arg4: memref<128x128xbf16, #tpu.memory_space<vmem>>, %arg5: memref<3x128xf32, #tpu.memory_space<vmem>>, %arg6: memref<32x128xbf16, #tpu.memory_space<vmem>>) attributes {dimension_semantics = [#tpu.dimension_semantics<parallel>], iteration_bounds = array<i64: 2>, scalar_prefetch = 0 : i64, scratch_operands = 0 : i64, tpu.core_type = #tpu.core_type<tc>, window_params = [{transform_indices = @transform_0, window_bounds = array<i64: 32, 128>}, {pipeline_mode = #tpu.pipeline_mode<synchronous>, transform_indices = @transform_1, window_bounds = array<i64: 128, 128>}, {pipeline_mode = #tpu.pipeline_mode<synchronous>, transform_indices = @transform_2, window_bounds = array<i64: 128, 128>}, {pipeline_mode = #tpu.pipeline_mode<synchronous>, transform_indices = @transform_3, window_bounds = array<i64: 128, 128>}, {pipeline_mode = #tpu.pipeline_mode<synchronous>, transform_indices = @transform_4, window_bounds = array<i64: 3, 128>}, {transform_indices = @transform_5, window_bounds = array<i64: 32, 128>}]} {
    %c0 = arith.constant 0 : index
    %c0_0 = arith.constant 0 : index
    %0 = vector.load %arg1[%c0, %c0_0] : memref<32x128xbf16, #tpu.memory_space<vmem>>, vector<32x128xbf16>
    %1 = arith.extf %0 : vector<32x128xbf16> to vector<32x128xf32>
    %cst = arith.constant dense<0.000000e+00> : vector<32xf32>
    %2 = vector.multi_reduction <add>, %1, %cst [1] : vector<32x128xf32> to vector<32xf32>
    %3 = vector.shape_cast %2 : vector<32xf32> to vector<32x1xf32>
    %cst_1 = arith.constant 1.280000e+02 : f32
    %4 = vector.broadcast %cst_1 : f32 to vector<32x1xf32>
    %5 = arith.divf %3, %4 : vector<32x1xf32>
    %6 = vector.broadcast %5 : vector<32x1xf32> to vector<32x128xf32>
    %7 = arith.subf %1, %6 : vector<32x128xf32>
    %8 = arith.mulf %7, %7 : vector<32x128xf32>
    %cst_2 = arith.constant dense<0.000000e+00> : vector<32xf32>
    %9 = vector.multi_reduction <add>, %8, %cst_2 [1] : vector<32x128xf32> to vector<32xf32>
    %10 = vector.shape_cast %9 : vector<32xf32> to vector<32x1xf32>
    %cst_3 = arith.constant 1.280000e+02 : f32
    %11 = vector.broadcast %cst_3 : f32 to vector<32x1xf32>
    %12 = arith.divf %10, %11 : vector<32x1xf32>
    %cst_4 = arith.constant 9.99999974E-6 : f32
    %13 = vector.broadcast %cst_4 : f32 to vector<32x1xf32>
    %14 = arith.addf %12, %13 : vector<32x1xf32>
    %15 = math.rsqrt %14 : vector<32x1xf32>
    %16 = vector.broadcast %15 : vector<32x1xf32> to vector<32x128xf32>
    %17 = arith.mulf %7, %16 : vector<32x128xf32>
    %c0_5 = arith.constant 0 : index
    %c0_6 = arith.constant 0 : index
    %18 = vector.load %arg2[%c0_5, %c0_6] : memref<128x128xbf16, #tpu.memory_space<vmem>>, vector<128x128xbf16>
    %c0_7 = arith.constant 0 : index
    %c0_8 = arith.constant 0 : index
    %19 = vector.load %arg5[%c0_7, %c0_8] : memref<3x128xf32, #tpu.memory_space<vmem>>, vector<1x128xf32>
    %20 = arith.truncf %17 : vector<32x128xf32> to vector<32x128xbf16>
    %cst_9 = arith.constant dense<0.000000e+00> : vector<32x128xf32>
    %21 = tpu.matmul %20, %18, %cst_9 {dimension_numbers = #tpu.dot_dimension_numbers<[1], [0], [0], [1], [0, 0, 1, 1], [], []>} : vector<32x128xbf16>, vector<128x128xbf16>, vector<32x128xf32> -> vector<32x128xf32>
    %22 = vector.broadcast %19 : vector<1x128xf32> to vector<32x128xf32>
    %23 = arith.addf %21, %22 : vector<32x128xf32>
    %cst_10 = arith.constant 0.000000e+00 : f32
    %24 = vector.broadcast %cst_10 : f32 to vector<32x128xf32>
    %25 = arith.maximumf %23, %24 : vector<32x128xf32>
    %cst_11 = arith.constant dense<0.000000e+00> : vector<32xf32>
    %26 = vector.multi_reduction <add>, %25, %cst_11 [1] : vector<32x128xf32> to vector<32xf32>
    %27 = vector.shape_cast %26 : vector<32xf32> to vector<32x1xf32>
    %cst_12 = arith.constant 1.280000e+02 : f32
    %28 = vector.broadcast %cst_12 : f32 to vector<32x1xf32>
    %29 = arith.divf %27, %28 : vector<32x1xf32>
    %30 = vector.broadcast %29 : vector<32x1xf32> to vector<32x128xf32>
    %31 = arith.subf %25, %30 : vector<32x128xf32>
    %32 = arith.mulf %31, %31 : vector<32x128xf32>
    %cst_13 = arith.constant dense<0.000000e+00> : vector<32xf32>
    %33 = vector.multi_reduction <add>, %32, %cst_13 [1] : vector<32x128xf32> to vector<32xf32>
    %34 = vector.shape_cast %33 : vector<32xf32> to vector<32x1xf32>
    %cst_14 = arith.constant 1.280000e+02 : f32
    %35 = vector.broadcast %cst_14 : f32 to vector<32x1xf32>
    %36 = arith.divf %34, %35 : vector<32x1xf32>
    %cst_15 = arith.constant 9.99999974E-6 : f32
    %37 = vector.broadcast %cst_15 : f32 to vector<32x1xf32>
    %38 = arith.addf %36, %37 : vector<32x1xf32>
    %39 = math.rsqrt %38 : vector<32x1xf32>
    %40 = vector.broadcast %39 : vector<32x1xf32> to vector<32x128xf32>
    %41 = arith.mulf %31, %40 : vector<32x128xf32>
    %c0_16 = arith.constant 0 : index
    %c0_17 = arith.constant 0 : index
    %42 = vector.load %arg3[%c0_16, %c0_17] : memref<128x128xbf16, #tpu.memory_space<vmem>>, vector<128x128xbf16>
    %c1 = arith.constant 1 : index
    %c0_18 = arith.constant 0 : index
    %43 = vector.load %arg5[%c1, %c0_18] : memref<3x128xf32, #tpu.memory_space<vmem>>, vector<1x128xf32>
    %44 = arith.truncf %41 : vector<32x128xf32> to vector<32x128xbf16>
    %cst_19 = arith.constant dense<0.000000e+00> : vector<32x128xf32>
    %45 = tpu.matmul %44, %42, %cst_19 {dimension_numbers = #tpu.dot_dimension_numbers<[1], [0], [0], [1], [0, 0, 1, 1], [], []>} : vector<32x128xbf16>, vector<128x128xbf16>, vector<32x128xf32> -> vector<32x128xf32>
    %46 = vector.broadcast %43 : vector<1x128xf32> to vector<32x128xf32>
    %47 = arith.addf %45, %46 : vector<32x128xf32>
    %cst_20 = arith.constant 0.000000e+00 : f32
    %48 = vector.broadcast %cst_20 : f32 to vector<32x128xf32>
    %49 = arith.maximumf %47, %48 : vector<32x128xf32>
    %c0_21 = arith.constant 0 : index
    %c0_22 = arith.constant 0 : index
    %50 = vector.load %arg4[%c0_21, %c0_22] : memref<128x128xbf16, #tpu.memory_space<vmem>>, vector<128x128xbf16>
    %c2 = arith.constant 2 : index
    %c0_23 = arith.constant 0 : index
    %51 = vector.load %arg5[%c2, %c0_23] : memref<3x128xf32, #tpu.memory_space<vmem>>, vector<1x128xf32>
    %52 = arith.truncf %49 : vector<32x128xf32> to vector<32x128xbf16>
    %cst_24 = arith.constant dense<0.000000e+00> : vector<32x128xf32>
    %53 = tpu.matmul %52, %50, %cst_24 {dimension_numbers = #tpu.dot_dimension_numbers<[1], [0], [0], [1], [0, 0, 1, 1], [], []>} : vector<32x128xbf16>, vector<128x128xbf16>, vector<32x128xf32> -> vector<32x128xf32>
    %54 = vector.broadcast %51 : vector<1x128xf32> to vector<32x128xf32>
    %55 = arith.addf %53, %54 : vector<32x128xf32>
    %56 = arith.truncf %55 : vector<32x128xf32> to vector<32x128xbf16>
    %c0_25 = arith.constant 0 : index
    %c0_26 = arith.constant 0 : index
    %57 = vector.load %arg6[%c0_25, %c0_26] : memref<32x128xbf16, #tpu.memory_space<vmem>>, vector<32x128xbf16>
    tpu.vector_store %arg6[%c0_25, %c0_26], %56 {strides = array<i32>} : memref<32x128xbf16, #tpu.memory_space<vmem>>, vector<32x128xbf16>,
    return
  }
  func.func @transform_0(%arg0: i32) -> (i32, i32) {
    %c0_i32 = arith.constant 0 : i32
    %c0_i32_0 = arith.constant 0 : i32
    return %arg0, %c0_i32 : i32, i32
  }
  func.func @transform_1(%arg0: i32) -> (i32, i32) {
    %c0_i32 = arith.constant 0 : i32
    %c0_i32_0 = arith.constant 0 : i32
    %c0_i32_1 = arith.constant 0 : i32
    return %c0_i32, %c0_i32_0 : i32, i32
  }
  func.func @transform_2(%arg0: i32) -> (i32, i32) {
    %c0_i32 = arith.constant 0 : i32
    %c0_i32_0 = arith.constant 0 : i32
    %c0_i32_1 = arith.constant 0 : i32
    return %c0_i32, %c0_i32_0 : i32, i32
  }
  func.func @transform_3(%arg0: i32) -> (i32, i32) {
    %c0_i32 = arith.constant 0 : i32
    %c0_i32_0 = arith.constant 0 : i32
    %c0_i32_1 = arith.constant 0 : i32
    return %c0_i32, %c0_i32_0 : i32, i32
  }
  func.func @transform_4(%arg0: i32) -> (i32, i32) {
    %c0_i32 = arith.constant 0 : i32
    %c0_i32_0 = arith.constant 0 : i32
    %c0_i32_1 = arith.constant 0 : i32
    return %c0_i32, %c0_i32_0 : i32, i32
  }
  func.func @transform_5(%arg0: i32) -> (i32, i32) {
    %c0_i32 = arith.constant 0 : i32
    %c0_i32_0 = arith.constant 0 : i32
    return %arg0, %c0_i32 : i32, i32
  }
}

</mosaic_0001>

<llo_original>
// kernel: tpu_custom_call.1
$region0: #{tpu_custom_call.1}
  #allocation0 [shape = 'u32[]', space=smem, size = 0x4, offset = 0x4, fixed_abs, tag = 'smem constant byte address 0x4 - core index']
  #allocation1 [shape = 'u32[72,128]{1,0:T(1,128)}', space=vmem, size = 0x9000, scoped, tag = 'internal scratch']
  %s0 = inlined_call_operand.hbm [shape: bf16[64,128], index: 0, kind: input, shape index: {}]
  %s1 = inlined_call_operand.hbm [shape: bf16[128,128], index: 1, kind: input, shape index: {}]
  %s2 = inlined_call_operand.hbm [shape: bf16[128,128], index: 2, kind: input, shape index: {}]
  %s3 = inlined_call_operand.hbm [shape: bf16[128,128], index: 3, kind: input, shape index: {}]
  %s4 = inlined_call_operand.hbm [shape: f32[3,128], index: 4, kind: input, shape index: {}]
  %s5 = inlined_call_operand.hbm [shape: bf16[64,128], index: 5, kind: output, shape index: {}]
  %s6 = sld [smem:[#allocation0]]
  $region73: #{tpu_custom_call.1} parent=0
    _
  %s8 = ssub.s32 1, %s6
  %s9 = scalar_select 0, %s8, %s6
  $region1: #{tpu_custom_call.1} parent=0
    #allocation2 [shape = 'u8[16384]{0}', space=vmem, size = 0x4000, scoped, tag = 'input window, operand 0']
    #allocation3 [shape = 's32[2]{0}', space=sflag, size = 0x8, scoped, tag = 'scoped memory for tpu_custom_call.1']
    #allocation4 [shape = 's32[2]{0}', space=sflag, size = 0x8, scoped, tag = 'scoped memory for tpu_custom_call.1']
    #allocation5 [shape = 'u8[32768]{0}', space=vmem, size = 0x8000, scoped, tag = 'input window, operand 1, single buffered']
    #allocation6 [shape = 's32[1]{0}', space=sflag, size = 0x4, scoped, tag = 'scoped memory for tpu_custom_call.1']
    #allocation7 [shape = 'u8[32768]{0}', space=vmem, size = 0x8000, scoped, tag = 'input window, operand 2, single buffered']
    #allocation8 [shape = 'u8[32768]{0}', space=vmem, size = 0x8000, scoped, tag = 'input window, operand 3, single buffered']
    #allocation9 [shape = 's32[1]{0}', space=sflag, size = 0x4, scoped, tag = 'scoped memory for tpu_custom_call.1']
    #allocation10 [shape = 'u8[2048]{0}', space=vmem, size = 0x800, scoped, tag = 'input window, operand 4, single buffered']
    #allocation11 [shape = 'u8[16384]{0}', space=vmem, size = 0x4000, scoped, tag = 'output window, operand 0']
    %10 = vsyncpa [#allocation3], 0
    %s11 = scalar_lea.sflag [#allocation3], 1
    %12 = vsyncpa %s11, 0
    %13 = vsyncpa [#allocation6], 0
    %14 = vsyncpa [#allocation9], 0
    %15 = vsyncpa [#allocation4], 0
    %s16 = scalar_lea.sflag [#allocation4], 1
    %17 = vsyncpa %s16, 0
    loop: start=0, step=1, limit=4
    $region2: #{tpu_custom_call.1} parent=1 // loop_pre_header
      _
    $region3: #{tpu_custom_call.1} parent=1 // loop_header
      %s19 = sphi 0, %s23
      %p20 = scmp.ge.s32.totalorder %s19, 4
      %s29 = sphi 0, %s31
      %s32 = sphi 0, %s29
      %s33 = sphi 0, %s32
      %s49 = sphi 0, %s33
      %s53 = sphi 0, %s53
      %s55 = sphi 0, %s53
      %s56 = sphi 0, %s55
      %s70 = sphi 0, %s56
      %s74 = sphi 0, %s74
      %s76 = sphi 0, %s74
      %s77 = sphi 0, %s76
      %s91 = sphi 0, %s77
      %s95 = sphi 0, %s95
      %s97 = sphi 0, %s95
      %s98 = sphi 0, %s97
      %s112 = sphi 0, %s98
      %s116 = sphi 0, %s116
      %s118 = sphi 0, %s116
      %s119 = sphi 0, %s118
      %s133 = sphi 0, %s119
      %s139 = sphi 0, %s141
      %s142 = sphi 0, %s139
      %s143 = sphi 0, %s142
      %s159 = sphi 0, %s143
    $region4: #{tpu_custom_call.1} parent=1 // loop_header_branch
      %22 = sbr.rel (%p20) target = $region8
    $region5: #{tpu_custom_call.1} parent=1 // loop_body
      %s24 = ssub.s32 %s19, 1
      %s25 = ssub.s32 %s19, 2
      %s26 = sadd.s32 %s19, 1
      %s27 = ssub.s32 %s19, %s26
      %p28 = scmp.eq.s32.totalorder %s27, 0
      %s30 = sadd.s32 %s29, 1
      %s31 = scalar_select %p28, %s29, %s30
      %p34 = pneg %p28
      %p35 = scmp.eq.s32.totalorder %s19, 1
      %p36 = por %p34, %p35
      %p37 = scmp.ne.s32.totalorder %s29, %s32
      %p38 = scmp.eq.s32.totalorder %s19, 0
      %p39 = por %p37, %p38
      %p40 = scmp.ne.s32.totalorder %s29, %s32
      %p41 = scmp.eq.s32.totalorder %s24, 1
      %p42 = por %p40, %p41
      %p43 = scmp.ne.s32.totalorder %s32, %s33
      %p44 = scmp.eq.s32.totalorder %s24, 0
      %p45 = por %p43, %p44
      %p46 = scmp.ne.s32.totalorder %s32, %s33
      %p47 = scmp.eq.s32.totalorder %s25, 1
      %p48 = por %p46, %p47
      %p50 = scmp.ne.s32.totalorder %s33, %s49
      %p51 = scmp.eq.s32.totalorder %s25, 0
      %p52 = por %p50, %p51
      %s54 = sadd.s32 %s53, 1
      %p57 = scmp.eq.s32.totalorder %s19, 1
      %p58 = scmp.ne.s32.totalorder %s53, %s55
      %p59 = scmp.eq.s32.totalorder %s19, 0
      %p60 = por %p58, %p59
      %p61 = scmp.ne.s32.totalorder %s53, %s55
      %p62 = scmp.eq.s32.totalorder %s24, 1
      %p63 = por %p61, %p62
      %p64 = scmp.ne.s32.totalorder %s55, %s56
      %p65 = scmp.eq.s32.totalorder %s24, 0
      %p66 = por %p64, %p65
      %p67 = scmp.ne.s32.totalorder %s55, %s56
      %p68 = scmp.eq.s32.totalorder %s25, 1
      %p69 = por %p67, %p68
      %p71 = scmp.ne.s32.totalorder %s56, %s70
      %p72 = scmp.eq.s32.totalorder %s25, 0
      %p73 = por %p71, %p72
      %s75 = sadd.s32 %s74, 1
      %p78 = scmp.eq.s32.totalorder %s19, 1
      %p79 = scmp.ne.s32.totalorder %s74, %s76
      %p80 = scmp.eq.s32.totalorder %s19, 0
      %p81 = por %p79, %p80
      %p82 = scmp.ne.s32.totalorder %s74, %s76
      %p83 = scmp.eq.s32.totalorder %s24, 1
      %p84 = por %p82, %p83
      %p85 = scmp.ne.s32.totalorder %s76, %s77
      %p86 = scmp.eq.s32.totalorder %s24, 0
      %p87 = por %p85, %p86
      %p88 = scmp.ne.s32.totalorder %s76, %s77
      %p89 = scmp.eq.s32.totalorder %s25, 1
      %p90 = por %p88, %p89
      %p92 = scmp.ne.s32.totalorder %s77, %s91
      %p93 = scmp.eq.s32.totalorder %s25, 0
      %p94 = por %p92, %p93
      %s96 = sadd.s32 %s95, 1
      %p99 = scmp.eq.s32.totalorder %s19, 1
      %p100 = scmp.ne.s32.totalorder %s95, %s97
      %p101 = scmp.eq.s32.totalorder %s19, 0
      %p102 = por %p100, %p101
      %p103 = scmp.ne.s32.totalorder %s95, %s97
      %p104 = scmp.eq.s32.totalorder %s24, 1
      %p105 = por %p103, %p104
      %p106 = scmp.ne.s32.totalorder %s97, %s98
      %p107 = scmp.eq.s32.totalorder %s24, 0
      %p108 = por %p106, %p107
      %p109 = scmp.ne.s32.totalorder %s97, %s98
      %p110 = scmp.eq.s32.totalorder %s25, 1
      %p111 = por %p109, %p110
      %p113 = scmp.ne.s32.totalorder %s98, %s112
      %p114 = scmp.eq.s32.totalorder %s25, 0
      %p115 = por %p113, %p114
      %s117 = sadd.s32 %s116, 1
      %p120 = scmp.eq.s32.totalorder %s19, 1
      %p121 = scmp.ne.s32.totalorder %s116, %s118
      %p122 = scmp.eq.s32.totalorder %s19, 0
      %p123 = por %p121, %p122
      %p124 = scmp.ne.s32.totalorder %s116, %s118
      %p125 = scmp.eq.s32.totalorder %s24, 1
      %p126 = por %p124, %p125
      %p127 = scmp.ne.s32.totalorder %s118, %s119
      %p128 = scmp.eq.s32.totalorder %s24, 0
      %p129 = por %p127, %p128
      %p130 = scmp.ne.s32.totalorder %s118, %s119
      %p131 = scmp.eq.s32.totalorder %s25, 1
      %p132 = por %p130, %p131
      %p134 = scmp.ne.s32.totalorder %s119, %s133
      %p135 = scmp.eq.s32.totalorder %s25, 0
      %p136 = por %p134, %p135
      %s137 = ssub.s32 %s19, %s26
      %p138 = scmp.eq.s32.totalorder %s137, 0
      %s140 = sadd.s32 %s139, 1
      %s141 = scalar_select %p138, %s139, %s140
      %p144 = pneg %p138
      %p145 = scmp.eq.s32.totalorder %s19, 1
      %p146 = por %p144, %p145
      %p147 = scmp.ne.s32.totalorder %s139, %s142
      %p148 = scmp.eq.s32.totalorder %s19, 0
      %p149 = por %p147, %p148
      %p150 = scmp.ne.s32.totalorder %s139, %s142
      %p151 = scmp.eq.s32.totalorder %s24, 1
      %p152 = por %p150, %p151
      %p153 = scmp.ne.s32.totalorder %s142, %s143
      %p154 = scmp.eq.s32.totalorder %s24, 0
      %p155 = por %p153, %p154
      %p156 = scmp.ne.s32.totalorder %s142, %s143
      %p157 = scmp.eq.s32.totalorder %s25, 1
      %p158 = por %p156, %p157
      %p160 = scmp.ne.s32.totalorder %s143, %s159
      %p161 = scmp.eq.s32.totalorder %s25, 0
      %p162 = por %p160, %p161
      %p163 = scmp.le.s32.totalorder 1, %s19
      %p164 = scmp.lt.s32.totalorder %s19, 3
      %p165 = pnand %p163, %p164
      %p166 = pneg %p165
      // Predicated region
      $region9: #{tpu_custom_call.1} parent=5 // pred_check
        _
      $region10: #{tpu_custom_call.1} parent=5 // pred_check_branch
        %168 = sbr.rel (%p165) target = $region12
      $region11: #{tpu_custom_call.1} parent=5 // pred_region
        %s169 = ssub.s32 %s19, 1
        // Predicated region
        $region13: #{tpu_custom_call.1} parent=11 // pred_check
          %p170 = pneg %p66
        $region14: #{tpu_custom_call.1} parent=11 // pred_check_branch
          %172 = sbr.rel (%p170) target = $region16
        $region15: #{tpu_custom_call.1} parent=11 // pred_region
          %174 = vsyncadd [#allocation6], 0
          %s175 = sshll.u32 %s1, 4
          %s176 = int_to_ptr.hbm [resolvable:$true] %s175
          %s177 = sshll.u32 [#allocation5], 4
          %s178 = int_to_ptr.vmem [resolvable:$true] %s177
          %183 = dma.hbm_to_vmem [thread:$0]  %s176, 1024, %s178, [#allocation6], 64, 64, 4
        $region16: #{tpu_custom_call.1} parent=11 // pred_fallthru
          _
        // Predicated region
        $region17: #{tpu_custom_call.1} parent=11 // pred_check
          %p184 = pneg %p87
        $region18: #{tpu_custom_call.1} parent=11 // pred_check_branch
          %186 = sbr.rel (%p184) target = $region20
        $region19: #{tpu_custom_call.1} parent=11 // pred_region
          %188 = vsyncadd [#allocation6], 0
          %s189 = sshll.u32 %s2, 4
          %s190 = int_to_ptr.hbm [resolvable:$true] %s189
          %s191 = sshll.u32 [#allocation7], 4
          %s192 = int_to_ptr.vmem [resolvable:$true] %s191
          %197 = dma.hbm_to_vmem [thread:$0]  %s190, 1024, %s192, [#allocation6], 64, 64, 4
        $region20: #{tpu_custom_call.1} parent=11 // pred_fallthru
          _
        // Predicated region
        $region21: #{tpu_custom_call.1} parent=11 // pred_check
          %p198 = pneg %p108
        $region22: #{tpu_custom_call.1} parent=11 // pred_check_branch
          %200 = sbr.rel (%p198) target = $region24
        $region23: #{tpu_custom_call.1} parent=11 // pred_region
          %202 = vsyncadd [#allocation9], 0
          %s203 = sshll.u32 %s3, 4
          %s204 = int_to_ptr.hbm [resolvable:$true] %s203
          %s205 = sshll.u32 [#allocation8], 4
          %s206 = int_to_ptr.vmem [resolvable:$true] %s205
          %211 = dma.hbm_to_vmem [thread:$0]  %s204, 1024, %s206, [#allocation9], 64, 64, 4
        $region24: #{tpu_custom_call.1} parent=11 // pred_fallthru
          _
        // Predicated region
        $region25: #{tpu_custom_call.1} parent=11 // pred_check
          %p212 = pneg %p129
        $region26: #{tpu_custom_call.1} parent=11 // pred_check_branch
          %214 = sbr.rel (%p212) target = $region28
        $region27: #{tpu_custom_call.1} parent=11 // pred_region
          %216 = vsyncadd [#allocation9], 0
          %s218 = sshll.u32 %s4, 4
          %s219 = int_to_ptr.hbm [resolvable:$true] %s218
          %s220 = sshll.u32 [#allocation10], 4
          %s221 = int_to_ptr.vmem [resolvable:$true] %s220
          %223 = dma.hbm_to_vmem [thread:$0]  %s219, 64, %s221, [#allocation9]
        $region28: #{tpu_custom_call.1} parent=11 // pred_fallthru
          _
      $region12: #{tpu_custom_call.1} parent=5 // pred_fallthru
        _
      %p224 = scmp.lt.s32.totalorder %s19, 2
      // Predicated region
      $region29: #{tpu_custom_call.1} parent=5 // pred_check
        %p225 = pneg %p224
      $region30: #{tpu_custom_call.1} parent=5 // pred_check_branch
        %227 = sbr.rel (%p225) target = $region32
      $region31: #{tpu_custom_call.1} parent=5 // pred_region
        // Predicated region
        $region33: #{tpu_custom_call.1} parent=31 // pred_check
          %p228 = pneg %p39
        $region34: #{tpu_custom_call.1} parent=31 // pred_check_branch
          %230 = sbr.rel (%p228) target = $region36
        $region35: #{tpu_custom_call.1} parent=31 // pred_region
          %s231 = sand.u32 %s29, 1
          %s232 = scalar_lea.sflag [#allocation3], %s231
          %s233 = sand.u32 %s29, 1
          %s234 = smul.addr %s233, 16
          %s235 = scalar_lea.vmem [#allocation2], %s234
          %s236 = smul.u32 4, %s19
          %238 = vsyncadd %s232, 0
          %s239 = smul.addr %s236, 4
          %s240 = scalar_lea.hbm %s0, %s239
          %s241 = sshll.u32 %s240, 4
          %s242 = int_to_ptr.hbm [resolvable:$true] %s241
          %s243 = sshll.u32 %s235, 4
          %s244 = int_to_ptr.vmem [resolvable:$true] %s243
          %249 = dma.hbm_to_vmem [thread:$0]  %s242, 256, %s244, %s232, 64, 64, 4
        $region36: #{tpu_custom_call.1} parent=31 // pred_fallthru
          _
      $region32: #{tpu_custom_call.1} parent=5 // pred_fallthru
        _
      %p250 = scmp.le.s32.totalorder 1, %s19
      %p251 = scmp.lt.s32.totalorder %s19, 3
      %p252 = pnand %p250, %p251
      %p253 = pneg %p252
      // Predicated region
      $region37: #{tpu_custom_call.1} parent=5 // pred_check
        _
      $region38: #{tpu_custom_call.1} parent=5 // pred_check_branch
        %255 = sbr.rel (%p252) target = $region40
      $region39: #{tpu_custom_call.1} parent=5 // pred_region
        %s256 = ssub.s32 %s19, 1
        %s257 = sand.u32 %s32, 1
        %s258 = scalar_lea.sflag [#allocation3], %s257
        %s259 = sand.u32 %s32, 1
        %s260 = smul.addr %s259, 16
        %s261 = scalar_lea.vmem [#allocation2], %s260
        // Predicated region
        $region41: #{tpu_custom_call.1} parent=39 // pred_check
          %p262 = pneg %p45
        $region42: #{tpu_custom_call.1} parent=39 // pred_check_branch
          %264 = sbr.rel (%p262) target = $region44
        $region43: #{tpu_custom_call.1} parent=39 // pred_region
          %266 = dma.done %s258, 256
        $region44: #{tpu_custom_call.1} parent=39 // pred_fallthru
          _
        // Predicated region
        $region45: #{tpu_custom_call.1} parent=39 // pred_check
          %p267 = pneg %p66
        $region46: #{tpu_custom_call.1} parent=39 // pred_check_branch
          %269 = sbr.rel (%p267) target = $region48
        $region47: #{tpu_custom_call.1} parent=39 // pred_region
          %271 = dma.done [#allocation6], 1024
        $region48: #{tpu_custom_call.1} parent=39 // pred_fallthru
          _
        // Predicated region
        $region49: #{tpu_custom_call.1} parent=39 // pred_check
          %p272 = pneg %p87
        $region50: #{tpu_custom_call.1} parent=39 // pred_check_branch
          %274 = sbr.rel (%p272) target = $region52
        $region51: #{tpu_custom_call.1} parent=39 // pred_region
          %276 = dma.done [#allocation6], 1024
        $region52: #{tpu_custom_call.1} parent=39 // pred_fallthru
          _
        // Predicated region
        $region53: #{tpu_custom_call.1} parent=39 // pred_check
          %p277 = pneg %p108
        $region54: #{tpu_custom_call.1} parent=39 // pred_check_branch
          %279 = sbr.rel (%p277) target = $region56
        $region55: #{tpu_custom_call.1} parent=39 // pred_region
          %281 = dma.done [#allocation9], 1024
        $region56: #{tpu_custom_call.1} parent=39 // pred_fallthru
          _
        // Predicated region
        $region57: #{tpu_custom_call.1} parent=39 // pred_check
          %p282 = pneg %p129
        $region58: #{tpu_custom_call.1} parent=39 // pred_check_branch
          %284 = sbr.rel (%p282) target = $region60
        $region59: #{tpu_custom_call.1} parent=39 // pred_region
          %286 = dma.done [#allocation9], 64
        $region60: #{tpu_custom_call.1} parent=39 // pred_fallthru
          _
        %s287 = sand.u32 %s32, 1
        %s288 = scalar_lea.sflag [#allocation3], %s287
        %s289 = sand.u32 %s32, 1
        %s290 = smul.addr %s289, 16
        %s291 = scalar_lea.vmem [#allocation2], %s290
        %p292 = pneg %p45
        %p293 = pneg %p42
        %p294 = pneg %p66
        %p295 = pneg %p63
        %p296 = pneg %p87
        %p297 = pneg %p84
        %p298 = pneg %p108
        %p299 = pneg %p105
        %p300 = pneg %p129
        %p301 = pneg %p126
        %p302 = pneg %p155
        %p303 = pneg %p152
        %s304 = sand.u32 %s142, 1
        %s305 = scalar_lea.sflag [#allocation4], %s304
        %s306 = sand.u32 %s142, 1
        %s307 = smul.addr %s306, 16
        %s308 = scalar_lea.vmem [#allocation11], %s307
        %s309 = smul.u32 4, %s24
        %s310 = smul.u32 4, %s24
        %v311 = vld [vmem:[%s261] sm:$0xf]
        %v312 = vld [vmem:[%s261 + $0x4] sm:$0xf]
        %v313 = vld [vmem:[%s261 + $0x8] sm:$0xf]
        %v314 = vld [vmem:[%s261 + $0xc] sm:$0xf]
        %v315 = vunpack.c.l.bf16 %v311
        %v316 = vunpack.c.l.bf16 %v312
        %v317 = vunpack.c.l.bf16 %v313
        %v318 = vunpack.c.l.bf16 %v314
        %319 = vadd.xlane.f32.xlu0 %v315
        %v320 = vpop.xlane.xlu0 %319
        %321 = vadd.xlane.f32.xlu0 %v316
        %v322 = vpop.xlane.xlu0 %321
        %323 = vadd.xlane.f32.xlu0 %v317
        %v324 = vpop.xlane.xlu0 %323
        %325 = vadd.xlane.f32.xlu0 %v318
        %v326 = vpop.xlane.xlu0 %325
        %v327 = vrcp.pop 128.0
        %v328 = vmul.f32 128.0, %v327
        %v329 = vsub.f32 1.0, %v328
        %v330 = vmul.f32 %v327, %v329
        %v331 = vadd.f32 %v327, %v330
        %vm332 = vweird.f32 %v327
        %v333 = vsel %vm332, %v327, %v331
        %v334 = vmul.f32 %v320, %v333
        %v335 = vmul.f32 %v322, %v333
        %v336 = vmul.f32 %v324, %v333
        %v337 = vmul.f32 %v326, %v333
        %v338 = vsub.f32 %v315, %v334
        %v339 = vsub.f32 %v316, %v335
        %v340 = vsub.f32 %v317, %v336
        %v341 = vsub.f32 %v318, %v337
        %v342 = vmul.f32 %v338, %v338
        %v343 = vmul.f32 %v339, %v339
        %v344 = vmul.f32 %v340, %v340
        %v345 = vmul.f32 %v341, %v341
        %346 = vadd.xlane.f32.xlu0 %v342
        %v347 = vpop.xlane.xlu0 %346
        %348 = vadd.xlane.f32.xlu0 %v343
        %v349 = vpop.xlane.xlu0 %348
        %350 = vadd.xlane.f32.xlu0 %v344
        %v351 = vpop.xlane.xlu0 %350
        %352 = vadd.xlane.f32.xlu0 %v345
        %v353 = vpop.xlane.xlu0 %352
        %v354 = vmul.f32 %v347, %v333
        %v355 = vmul.f32 %v349, %v333
        %v356 = vmul.f32 %v351, %v333
        %v357 = vmul.f32 %v353, %v333
        %v358 = vadd.f32 %v354, 1e-05
        %v359 = vadd.f32 %v355, 1e-05
        %v360 = vadd.f32 %v356, 1e-05
        %v361 = vadd.f32 %v357, 1e-05
        %v362 = vrsqrt.pop %v358
        %v363 = vmul.f32 %v362, %v358
        %v364 = vmul.f32 %v363, %v362
        %v365 = vmul.f32 0.5, %v364
        %v366 = vsub.f32 1.5, %v365
        %v367 = vmul.f32 %v362, %v366
        %vm368 = vweird.f32 %v358
        %vm369 = vweird.f32 %v362
        %vm370 = vmor %vm368, %vm369
        %v371 = vsel %vm370, %v362, %v367
        %v372 = vrsqrt.pop %v359
        %v373 = vmul.f32 %v372, %v359
        %v374 = vmul.f32 %v373, %v372
        %v375 = vmul.f32 0.5, %v374
        %v376 = vsub.f32 1.5, %v375
        %v377 = vmul.f32 %v372, %v376
        %vm378 = vweird.f32 %v359
        %vm379 = vweird.f32 %v372
        %vm380 = vmor %vm378, %vm379
        %v381 = vsel %vm380, %v372, %v377
        %v382 = vrsqrt.pop %v360
        %v383 = vmul.f32 %v382, %v360
        %v384 = vmul.f32 %v383, %v382
        %v385 = vmul.f32 0.5, %v384
        %v386 = vsub.f32 1.5, %v385
        %v387 = vmul.f32 %v382, %v386
        %vm388 = vweird.f32 %v360
        %vm389 = vweird.f32 %v382
        %vm390 = vmor %vm388, %vm389
        %v391 = vsel %vm390, %v382, %v387
        %v392 = vrsqrt.pop %v361
        %v393 = vmul.f32 %v392, %v361
        %v394 = vmul.f32 %v393, %v392
        %v395 = vmul.f32 0.5, %v394
        %v396 = vsub.f32 1.5, %v395
        %v397 = vmul.f32 %v392, %v396
        %vm398 = vweird.f32 %v361
        %vm399 = vweird.f32 %v392
        %vm400 = vmor %vm398, %vm399
        %v401 = vsel %vm400, %v392, %v397
        %v402 = vmul.f32 %v338, %v371
        %v403 = vmul.f32 %v339, %v381
        %v404 = vmul.f32 %v340, %v391
        %v405 = vmul.f32 %v341, %v401
        %v406 = vld [vmem:[#allocation5] sm:$0xf]
        %v407 = vld [vmem:[#allocation5 + $0x4] sm:$0xf]
        %v408 = vld [vmem:[#allocation5 + $0x8] sm:$0xf]
        %v409 = vld [vmem:[#allocation5 + $0xc] sm:$0xf]
        %v410 = vld [vmem:[#allocation5 + $0x10] sm:$0xf]
        %v411 = vld [vmem:[#allocation5 + $0x14] sm:$0xf]
        %v412 = vld [vmem:[#allocation5 + $0x18] sm:$0xf]
        %v413 = vld [vmem:[#allocation5 + $0x1c] sm:$0xf]
        %v414 = vld [vmem:[#allocation5 + $0x20] sm:$0xf]
        %v415 = vld [vmem:[#allocation5 + $0x24] sm:$0xf]
        %v416 = vld [vmem:[#allocation5 + $0x28] sm:$0xf]
        %v417 = vld [vmem:[#allocation5 + $0x2c] sm:$0xf]
        %v418 = vld [vmem:[#allocation5 + $0x30] sm:$0xf]
        %v419 = vld [vmem:[#allocation5 + $0x34] sm:$0xf]
        %v420 = vld [vmem:[#allocation5 + $0x38] sm:$0xf]
        %v421 = vld [vmem:[#allocation5 + $0x3c] sm:$0xf]
        %v422 = vld [vmem:[#allocation10] sm:$0x1]
        %v423 = vpack.c.bf16 %v403, %v402
        %v424 = vpack.c.bf16 %v405, %v404
        %v425 = vperm.slane %v422, 0
        %v442 = vunpack.c.l.b16 %v406
        %v443 = vunpack.c.l.b16 %v407
        %v444 = vunpack.c.l.b16 %v408
        %v445 = vunpack.c.l.b16 %v409
        %v446 = vunpack.c.l.b16 %v410
        %v447 = vunpack.c.l.b16 %v411
        %v448 = vunpack.c.l.b16 %v412
        %v449 = vunpack.c.l.b16 %v413
        %v450 = vunpack.c.l.b16 %v414
        %v451 = vunpack.c.l.b16 %v415
        %v452 = vunpack.c.l.b16 %v416
        %v453 = vunpack.c.l.b16 %v417
        %v454 = vunpack.c.l.b16 %v418
        %v455 = vunpack.c.l.b16 %v419
        %v456 = vunpack.c.l.b16 %v420
        %v457 = vunpack.c.l.b16 %v421
        %v458 = vpack.c.b16 %v443, %v442
        %v459 = vpack.c.b16 %v445, %v444
        %v460 = vpack.c.b16 %v447, %v446
        %v461 = vpack.c.b16 %v449, %v448
        %v462 = vpack.c.b16 %v451, %v450
        %v463 = vpack.c.b16 %v453, %v452
        %v464 = vpack.c.b16 %v455, %v454
        %v465 = vpack.c.b16 %v457, %v456
        %474 = vmatpush.bf16.msra.mxu0 %v465
        %475 = vmatpush.bf16.msra.mxu0 %v464
        %476 = vmatpush.bf16.msra.mxu0 %v463
        %477 = vmatpush.bf16.msra.mxu0 %v462
        %478 = vmatpush.bf16.msra.mxu0 %v461
        %479 = vmatpush.bf16.msra.mxu0 %v460
        %480 = vmatpush.bf16.msra.mxu0 %v459
        %481 = vmatpush.bf16.msra.mxu0 %v458
        %482 = vmatmul.bf16.gmra.mxu0 %v423
        %v483 = vpop.f32.mrf.mxu0
        %v484 = vadd.f32 %v425, %v483
        %v485 = vpop.f32.mrf.mxu0
        %v486 = vadd.f32 %v425, %v485
        %487 = vmatmul.bf16.gmra.mxu0 %v424
        %v488 = vpop.f32.mrf.mxu0
        %v489 = vadd.f32 %v425, %v488
        %v490 = vpop.f32.mrf.mxu0
        %v491 = vadd.f32 %v425, %v490
        %492 = vdwg.mxu0
        %v493 = vmax.f32 %v484, 0.0
        %v494 = vmax.f32 %v486, 0.0
        %v495 = vmax.f32 %v489, 0.0
        %v496 = vmax.f32 %v491, 0.0
        %497 = vadd.xlane.f32.xlu0 %v493
        %v498 = vpop.xlane.xlu0 %497
        %499 = vadd.xlane.f32.xlu0 %v494
        %v500 = vpop.xlane.xlu0 %499
        %501 = vadd.xlane.f32.xlu0 %v495
        %v502 = vpop.xlane.xlu0 %501
        %503 = vadd.xlane.f32.xlu0 %v496
        %v504 = vpop.xlane.xlu0 %503
        %v505 = vmul.f32 %v498, %v333
        %v506 = vmul.f32 %v500, %v333
        %v507 = vmul.f32 %v502, %v333
        %v508 = vmul.f32 %v504, %v333
        %v509 = vsub.f32 %v493, %v505
        %v510 = vsub.f32 %v494, %v506
        %v511 = vsub.f32 %v495, %v507
        %v512 = vsub.f32 %v496, %v508
        %v513 = vmul.f32 %v509, %v509
        %v514 = vmul.f32 %v510, %v510
        %v515 = vmul.f32 %v511, %v511
        %v516 = vmul.f32 %v512, %v512
        %517 = vadd.xlane.f32.xlu0 %v513
        %v518 = vpop.xlane.xlu0 %517
        %519 = vadd.xlane.f32.xlu0 %v514
        %v520 = vpop.xlane.xlu0 %519
        %521 = vadd.xlane.f32.xlu0 %v515
        %v522 = vpop.xlane.xlu0 %521
        %523 = vadd.xlane.f32.xlu0 %v516
        %v524 = vpop.xlane.xlu0 %523
        %v525 = vmul.f32 %v518, %v333
        %v526 = vmul.f32 %v520, %v333
        %v527 = vmul.f32 %v522, %v333
        %v528 = vmul.f32 %v524, %v333
        %v529 = vadd.f32 %v525, 1e-05
        %v530 = vadd.f32 %v526, 1e-05
        %v531 = vadd.f32 %v527, 1e-05
        %v532 = vadd.f32 %v528, 1e-05
        %v533 = vrsqrt.pop %v529
        %v534 = vmul.f32 %v533, %v529
        %v535 = vmul.f32 %v534, %v533
        %v536 = vmul.f32 0.5, %v535
        %v537 = vsub.f32 1.5, %v536
        %v538 = vmul.f32 %v533, %v537
        %vm539 = vweird.f32 %v529
        %vm540 = vweird.f32 %v533
        %vm541 = vmor %vm539, %vm540
        %v542 = vsel %vm541, %v533, %v538
        %v543 = vrsqrt.pop %v530
        %v544 = vmul.f32 %v543, %v530
        %v545 = vmul.f32 %v544, %v543
        %v546 = vmul.f32 0.5, %v545
        %v547 = vsub.f32 1.5, %v546
        %v548 = vmul.f32 %v543, %v547
        %vm549 = vweird.f32 %v530
        %vm550 = vweird.f32 %v543
        %vm551 = vmor %vm549, %vm550
        %v552 = vsel %vm551, %v543, %v548
        %v553 = vrsqrt.pop %v531
        %v554 = vmul.f32 %v553, %v531
        %v555 = vmul.f32 %v554, %v553
        %v556 = vmul.f32 0.5, %v555
        %v557 = vsub.f32 1.5, %v556
        %v558 = vmul.f32 %v553, %v557
        %vm559 = vweird.f32 %v531
        %vm560 = vweird.f32 %v553
        %vm561 = vmor %vm559, %vm560
        %v562 = vsel %vm561, %v553, %v558
        %v563 = vrsqrt.pop %v532
        %v564 = vmul.f32 %v563, %v532
        %v565 = vmul.f32 %v564, %v563
        %v566 = vmul.f32 0.5, %v565
        %v567 = vsub.f32 1.5, %v566
        %v568 = vmul.f32 %v563, %v567
        %vm569 = vweird.f32 %v532
        %vm570 = vweird.f32 %v563
        %vm571 = vmor %vm569, %vm570
        %v572 = vsel %vm571, %v563, %v568
        %v573 = vmul.f32 %v509, %v542
        %v574 = vmul.f32 %v510, %v552
        %v575 = vmul.f32 %v511, %v562
        %v576 = vmul.f32 %v512, %v572
        %v577 = vld [vmem:[#allocation7] sm:$0xf]
        %v578 = vld [vmem:[#allocation7 + $0x4] sm:$0xf]
        %v579 = vld [vmem:[#allocation7 + $0x8] sm:$0xf]
        %v580 = vld [vmem:[#allocation7 + $0xc] sm:$0xf]
        %v581 = vld [vmem:[#allocation7 + $0x10] sm:$0xf]
        %v582 = vld [vmem:[#allocation7 + $0x14] sm:$0xf]
        %v583 = vld [vmem:[#allocation7 + $0x18] sm:$0xf]
        %v584 = vld [vmem:[#allocation7 + $0x1c] sm:$0xf]
        %v585 = vld [vmem:[#allocation7 + $0x20] sm:$0xf]
        %v586 = vld [vmem:[#allocation7 + $0x24] sm:$0xf]
        %v587 = vld [vmem:[#allocation7 + $0x28] sm:$0xf]
        %v588 = vld [vmem:[#allocation7 + $0x2c] sm:$0xf]
        %v589 = vld [vmem:[#allocation7 + $0x30] sm:$0xf]
        %v590 = vld [vmem:[#allocation7 + $0x34] sm:$0xf]
        %v591 = vld [vmem:[#allocation7 + $0x38] sm:$0xf]
        %v592 = vld [vmem:[#allocation7 + $0x3c] sm:$0xf]
        %v593 = vld [vmem:[#allocation10 + $0x1] sm:$0x1]
        %v594 = vpack.c.bf16 %v574, %v573
        %v595 = vpack.c.bf16 %v576, %v575
        %v596 = vperm.slane %v593, 0
        %v613 = vunpack.c.l.b16 %v577
        %v614 = vunpack.c.l.b16 %v578
        %v615 = vunpack.c.l.b16 %v579
        %v616 = vunpack.c.l.b16 %v580
        %v617 = vunpack.c.l.b16 %v581
        %v618 = vunpack.c.l.b16 %v582
        %v619 = vunpack.c.l.b16 %v583
        %v620 = vunpack.c.l.b16 %v584
        %v621 = vunpack.c.l.b16 %v585
        %v622 = vunpack.c.l.b16 %v586
        %v623 = vunpack.c.l.b16 %v587
        %v624 = vunpack.c.l.b16 %v588
        %v625 = vunpack.c.l.b16 %v589
        %v626 = vunpack.c.l.b16 %v590
        %v627 = vunpack.c.l.b16 %v591
        %v628 = vunpack.c.l.b16 %v592
        %v629 = vpack.c.b16 %v614, %v613
        %v630 = vpack.c.b16 %v616, %v615
        %v631 = vpack.c.b16 %v618, %v617
        %v632 = vpack.c.b16 %v620, %v619
        %v633 = vpack.c.b16 %v622, %v621
        %v634 = vpack.c.b16 %v624, %v623
        %v635 = vpack.c.b16 %v626, %v625
        %v636 = vpack.c.b16 %v628, %v627
        %645 = vmatpush.bf16.msra.mxu0 %v636
        %646 = vmatpush.bf16.msra.mxu0 %v635
        %647 = vmatpush.bf16.msra.mxu0 %v634
        %648 = vmatpush.bf16.msra.mxu0 %v633
        %649 = vmatpush.bf16.msra.mxu0 %v632
        %650 = vmatpush.bf16.msra.mxu0 %v631
        %651 = vmatpush.bf16.msra.mxu0 %v630
        %652 = vmatpush.bf16.msra.mxu0 %v629
        %653 = vmatmul.bf16.gmra.mxu0 %v594
        %v654 = vpop.f32.mrf.mxu0
        %v655 = vadd.f32 %v596, %v654
        %v656 = vpop.f32.mrf.mxu0
        %v657 = vadd.f32 %v596, %v656
        %658 = vmatmul.bf16.gmra.mxu0 %v595
        %v659 = vpop.f32.mrf.mxu0
        %v660 = vadd.f32 %v596, %v659
        %v661 = vpop.f32.mrf.mxu0
        %v662 = vadd.f32 %v596, %v661
        %663 = vdwg.mxu0
        %v664 = vmax.f32 %v655, 0.0
        %v665 = vmax.f32 %v657, 0.0
        %v666 = vmax.f32 %v660, 0.0
        %v667 = vmax.f32 %v662, 0.0
        %v668 = vld [vmem:[#allocation8] sm:$0xf]
        %v669 = vld [vmem:[#allocation8 + $0x4] sm:$0xf]
        %v670 = vld [vmem:[#allocation8 + $0x8] sm:$0xf]
        %v671 = vld [vmem:[#allocation8 + $0xc] sm:$0xf]
        %v672 = vld [vmem:[#allocation8 + $0x10] sm:$0xf]
        %v673 = vld [vmem:[#allocation8 + $0x14] sm:$0xf]
        %v674 = vld [vmem:[#allocation8 + $0x18] sm:$0xf]
        %v675 = vld [vmem:[#allocation8 + $0x1c] sm:$0xf]
        %v676 = vld [vmem:[#allocation8 + $0x20] sm:$0xf]
        %v677 = vld [vmem:[#allocation8 + $0x24] sm:$0xf]
        %v678 = vld [vmem:[#allocation8 + $0x28] sm:$0xf]
        %v679 = vld [vmem:[#allocation8 + $0x2c] sm:$0xf]
        %v680 = vld [vmem:[#allocation8 + $0x30] sm:$0xf]
        %v681 = vld [vmem:[#allocation8 + $0x34] sm:$0xf]
        %v682 = vld [vmem:[#allocation8 + $0x38] sm:$0xf]
        %v683 = vld [vmem:[#allocation8 + $0x3c] sm:$0xf]
        %v684 = vld [vmem:[#allocation10 + $0x2] sm:$0x1]
        %v685 = vpack.c.bf16 %v665, %v664
        %v686 = vpack.c.bf16 %v667, %v666
        %v687 = vperm.slane %v684, 0
        %v704 = vunpack.c.l.b16 %v668
        %v705 = vunpack.c.l.b16 %v669
        %v706 = vunpack.c.l.b16 %v670
        %v707 = vunpack.c.l.b16 %v671
        %v708 = vunpack.c.l.b16 %v672
        %v709 = vunpack.c.l.b16 %v673
        %v710 = vunpack.c.l.b16 %v674
        %v711 = vunpack.c.l.b16 %v675
        %v712 = vunpack.c.l.b16 %v676
        %v713 = vunpack.c.l.b16 %v677
        %v714 = vunpack.c.l.b16 %v678
        %v715 = vunpack.c.l.b16 %v679
        %v716 = vunpack.c.l.b16 %v680
        %v717 = vunpack.c.l.b16 %v681
        %v718 = vunpack.c.l.b16 %v682
        %v719 = vunpack.c.l.b16 %v683
        %v720 = vpack.c.b16 %v705, %v704
        %v721 = vpack.c.b16 %v707, %v706
        %v722 = vpack.c.b16 %v709, %v708
        %v723 = vpack.c.b16 %v711, %v710
        %v724 = vpack.c.b16 %v713, %v712
        %v725 = vpack.c.b16 %v715, %v714
        %v726 = vpack.c.b16 %v717, %v716
        %v727 = vpack.c.b16 %v719, %v718
        %736 = vmatpush.bf16.msra.mxu0 %v727
        %737 = vmatpush.bf16.msra.mxu0 %v726
        %738 = vmatpush.bf16.msra.mxu0 %v725
        %739 = vmatpush.bf16.msra.mxu0 %v724
        %740 = vmatpush.bf16.msra.mxu0 %v723
        %741 = vmatpush.bf16.msra.mxu0 %v722
        %742 = vmatpush.bf16.msra.mxu0 %v721
        %743 = vmatpush.bf16.msra.mxu0 %v720
        %744 = vmatmul.bf16.gmra.mxu0 %v685
        %v745 = vpop.f32.mrf.mxu0
        %v746 = vadd.f32 %v687, %v745
        %v747 = vpop.f32.mrf.mxu0
        %v748 = vadd.f32 %v687, %v747
        %749 = vmatmul.bf16.gmra.mxu0 %v686
        %v750 = vpop.f32.mrf.mxu0
        %v751 = vadd.f32 %v687, %v750
        %v752 = vpop.f32.mrf.mxu0
        %v753 = vadd.f32 %v687, %v752
        %754 = vdwg.mxu0
        %v755 = vpack.c.bf16 %v746, %v746
        %v756 = vpack.c.bf16 %v748, %v748
        %v757 = vpack.c.bf16 %v751, %v751
        %v758 = vpack.c.bf16 %v753, %v753
        %759 = vst [vmem:[%s308] sm:$0xf] %v755
        %760 = vst [vmem:[%s308 + $0x4] sm:$0xf] %v756
        %761 = vst [vmem:[%s308 + $0x8] sm:$0xf] %v757
        %762 = vst [vmem:[%s308 + $0xc] sm:$0xf] %v758
        %s763 = sand.u32 %s142, 1
        %s764 = scalar_lea.sflag [#allocation4], %s763
        %s765 = sand.u32 %s142, 1
        %s766 = smul.addr %s765, 16
        %s767 = scalar_lea.vmem [#allocation11], %s766
        // Predicated region
        $region61: #{tpu_custom_call.1} parent=39 // pred_check
          %p768 = pneg %p152
        $region62: #{tpu_custom_call.1} parent=39 // pred_check_branch
          %770 = sbr.rel (%p768) target = $region64
        $region63: #{tpu_custom_call.1} parent=39 // pred_region
          %s771 = smul.u32 4, %s24
          %773 = vsyncadd %s764, 0
          %s774 = smul.addr %s771, 4
          %s775 = scalar_lea.hbm %s5, %s774
          %s776 = sshll.u32 %s767, 4
          %s777 = int_to_ptr.vmem [resolvable:$true] %s776
          %s778 = sshll.u32 %s775, 4
          %s779 = int_to_ptr.hbm [resolvable:$true] %s778
          %784 = dma.vmem_to_hbm [thread:$0]  %s777, 256, %s779, %s764, 64, 64, 4
        $region64: #{tpu_custom_call.1} parent=39 // pred_fallthru
          _
      $region40: #{tpu_custom_call.1} parent=5 // pred_fallthru
        _
      %p785 = scmp.le.s32.totalorder 2, %s19
      // Predicated region
      $region65: #{tpu_custom_call.1} parent=5 // pred_check
        %p786 = pneg %p785
      $region66: #{tpu_custom_call.1} parent=5 // pred_check_branch
        %788 = sbr.rel (%p786) target = $region68
      $region67: #{tpu_custom_call.1} parent=5 // pred_region
        %s789 = ssub.s32 %s19, 2
        // Predicated region
        $region69: #{tpu_custom_call.1} parent=67 // pred_check
          %p790 = pneg %p158
        $region70: #{tpu_custom_call.1} parent=67 // pred_check_branch
          %792 = sbr.rel (%p790) target = $region72
        $region71: #{tpu_custom_call.1} parent=67 // pred_region
          %s793 = sand.u32 %s143, 1
          %s794 = scalar_lea.sflag [#allocation4], %s793
          %s795 = sand.u32 %s143, 1
          %s796 = smul.addr %s795, 16
          %s797 = scalar_lea.vmem [#allocation11], %s796
          %799 = dma.done %s794, 256
        $region72: #{tpu_custom_call.1} parent=67 // pred_fallthru
          _
      $region68: #{tpu_custom_call.1} parent=5 // pred_fallthru
        _
    $region6: #{tpu_custom_call.1} parent=1 // loop_footer
      %s23 = sadd.s32 1, %s19
    $region7: #{tpu_custom_call.1} parent=1 // loop_footer_branch
      %18 = sbr.rel target = $region3
    $region8: #{tpu_custom_call.1} parent=1 // loop_exit
      _
    %800 = vsyncpa [#allocation3], 1
    %s801 = scalar_lea.sflag [#allocation3], 1
    %802 = vsyncpa %s801, 1
    %803 = vsyncpa [#allocation6], 1
    %804 = vsyncpa [#allocation9], 1
    %805 = vsyncpa [#allocation4], 1
    %s806 = scalar_lea.sflag [#allocation4], 1
    %807 = vsyncpa %s806, 1

// kernel: tpu_custom_call.1
$region0: #{tpu_custom_call.1}
  #allocation0 [shape = 'u32[]', space=smem, size = 0x4, offset = 0x4, fixed_abs, tag = 'smem constant byte address 0x4 - core index']
  #allocation1 [shape = 'u32[72,128]{1,0:T(1,128)}', space=vmem, size = 0x9000, scoped, tag = 'internal scratch']
  %s0 = inlined_call_operand.hbm [shape: bf16[64,128], index: 0, kind: input, shape index: {}]
  %s1 = inlined_call_operand.hbm [shape: bf16[128,128], index: 1, kind: input, shape index: {}]
  %s2 = inlined_call_operand.hbm [shape: bf16[128,128], index: 2, kind: input, shape index: {}]
  %s3 = inlined_call_operand.hbm [shape: bf16[128,128], index: 3, kind: input, shape index: {}]
  %s4 = inlined_call_operand.hbm [shape: f32[3,128], index: 4, kind: input, shape index: {}]
  %s5 = inlined_call_operand.hbm [shape: bf16[64,128], index: 5, kind: output, shape index: {}]
  %s6 = sld [smem:[#allocation0]]
  $region73: #{tpu_custom_call.1} parent=0
    _
  %s8 = ssub.s32 1, %s6
  %s9 = scalar_select 0, %s8, %s6
  $region1: #{tpu_custom_call.1} parent=0
    #allocation2 [shape = 'u8[16384]{0}', space=vmem, size = 0x4000, scoped, tag = 'input window, operand 0']
    #allocation3 [shape = 's32[2]{0}', space=sflag, size = 0x8, scoped, tag = 'scoped memory for tpu_custom_call.1']
    #allocation4 [shape = 's32[2]{0}', space=sflag, size = 0x8, scoped, tag = 'scoped memory for tpu_custom_call.1']
    #allocation5 [shape = 'u8[32768]{0}', space=vmem, size = 0x8000, scoped, tag = 'input window, operand 1, single buffered']
    #allocation6 [shape = 's32[1]{0}', space=sflag, size = 0x4, scoped, tag = 'scoped memory for tpu_custom_call.1']
    #allocation7 [shape = 'u8[32768]{0}', space=vmem, size = 0x8000, scoped, tag = 'input window, operand 2, single buffered']
    #allocation8 [shape = 'u8[32768]{0}', space=vmem, size = 0x8000, scoped, tag = 'input window, operand 3, single buffered']
    #allocation9 [shape = 's32[1]{0}', space=sflag, size = 0x4, scoped, tag = 'scoped memory for tpu_custom_call.1']
    #allocation10 [shape = 'u8[2048]{0}', space=vmem, size = 0x800, scoped, tag = 'input window, operand 4, single buffered']
    #allocation11 [shape = 'u8[16384]{0}', space=vmem, size = 0x4000, scoped, tag = 'output window, operand 0']
    %10 = vsyncpa [#allocation3], 0
    %s11 = scalar_lea.sflag [#allocation3], 1
    %12 = vsyncpa %s11, 0
    %13 = vsyncpa [#allocation6], 0
    %14 = vsyncpa [#allocation9], 0
    %15 = vsyncpa [#allocation4], 0
    %s16 = scalar_lea.sflag [#allocation4], 1
    %17 = vsyncpa %s16, 0
    loop: start=0, step=1, limit=4
    $region2: #{tpu_custom_call.1} parent=1 // loop_pre_header
      _
    $region3: #{tpu_custom_call.1} parent=1 // loop_header
      %s19 = sphi 0, %s23
      %p20 = scmp.ge.s32.totalorder %s19, 4
      %s29 = sphi 0, %s31
      %s32 = sphi 0, %s29
      %s33 = sphi 0, %s32
      %s49 = sphi 0, %s33
      %s53 = sphi 0, %s53
      %s55 = sphi 0, %s53
      %s56 = sphi 0, %s55
      %s70 = sphi 0, %s56
      %s74 = sphi 0, %s74
      %s76 = sphi 0, %s74
      %s77 = sphi 0, %s76
      %s91 = sphi 0, %s77
      %s95 = sphi 0, %s95
      %s97 = sphi 0, %s95
      %s98 = sphi 0, %s97
      %s112 = sphi 0, %s98
      %s116 = sphi 0, %s116
      %s118 = sphi 0, %s116
      %s119 = sphi 0, %s118
      %s133 = sphi 0, %s119
      %s139 = sphi 0, %s141
      %s142 = sphi 0, %s139
      %s143 = sphi 0, %s142
      %s159 = sphi 0, %s143
    $region4: #{tpu_custom_call.1} parent=1 // loop_header_branch
      %22 = sbr.rel (%p20) target = $region8
    $region5: #{tpu_custom_call.1} parent=1 // loop_body
      %s24 = ssub.s32 %s19, 1
      %s25 = ssub.s32 %s19, 2
      %s26 = sadd.s32 %s19, 1
      %s27 = ssub.s32 %s19, %s26
      %p28 = scmp.eq.s32.totalorder %s27, 0
      %s30 = sadd.s32 %s29, 1
      %s31 = scalar_select %p28, %s29, %s30
      %p34 = pneg %p28
      %p35 = scmp.eq.s32.totalorder %s19, 1
      %p36 = por %p34, %p35
      %p37 = scmp.ne.s32.totalorder %s29, %s32
      %p38 = scmp.eq.s32.totalorder %s19, 0
      %p39 = por %p37, %p38
      %p40 = scmp.ne.s32.totalorder %s29, %s32
      %p41 = scmp.eq.s32.totalorder %s24, 1
      %p42 = por %p40, %p41
      %p43 = scmp.ne.s32.totalorder %s32, %s33
      %p44 = scmp.eq.s32.totalorder %s24, 0
      %p45 = por %p43, %p44
      %p46 = scmp.ne.s32.totalorder %s32, %s33
      %p47 = scmp.eq.s32.totalorder %s25, 1
      %p48 = por %p46, %p47
      %p50 = scmp.ne.s32.totalorder %s33, %s49
      %p51 = scmp.eq.s32.totalorder %s25, 0
      %p52 = por %p50, %p51
      %s54 = sadd.s32 %s53, 1
      %p57 = scmp.eq.s32.totalorder %s19, 1
      %p58 = scmp.ne.s32.totalorder %s53, %s55
      %p59 = scmp.eq.s32.totalorder %s19, 0
      %p60 = por %p58, %p59
      %p61 = scmp.ne.s32.totalorder %s53, %s55
      %p62 = scmp.eq.s32.totalorder %s24, 1
      %p63 = por %p61, %p62
      %p64 = scmp.ne.s32.totalorder %s55, %s56
      %p65 = scmp.eq.s32.totalorder %s24, 0
      %p66 = por %p64, %p65
      %p67 = scmp.ne.s32.totalorder %s55, %s56
      %p68 = scmp.eq.s32.totalorder %s25, 1
      %p69 = por %p67, %p68
      %p71 = scmp.ne.s32.totalorder %s56, %s70
      %p72 = scmp.eq.s32.totalorder %s25, 0
      %p73 = por %p71, %p72
      %s75 = sadd.s32 %s74, 1
      %p78 = scmp.eq.s32.totalorder %s19, 1
      %p79 = scmp.ne.s32.totalorder %s74, %s76
      %p80 = scmp.eq.s32.totalorder %s19, 0
      %p81 = por %p79, %p80
      %p82 = scmp.ne.s32.totalorder %s74, %s76
      %p83 = scmp.eq.s32.totalorder %s24, 1
      %p84 = por %p82, %p83
      %p85 = scmp.ne.s32.totalorder %s76, %s77
      %p86 = scmp.eq.s32.totalorder %s24, 0
      %p87 = por %p85, %p86
      %p88 = scmp.ne.s32.totalorder %s76, %s77
      %p89 = scmp.eq.s32.totalorder %s25, 1
      %p90 = por %p88, %p89
      %p92 = scmp.ne.s32.totalorder %s77, %s91
      %p93 = scmp.eq.s32.totalorder %s25, 0
      %p94 = por %p92, %p93
      %s96 = sadd.s32 %s95, 1
      %p99 = scmp.eq.s32.totalorder %s19, 1
      %p100 = scmp.ne.s32.totalorder %s95, %s97
      %p101 = scmp.eq.s32.totalorder %s19, 0
      %p102 = por %p100, %p101
      %p103 = scmp.ne.s32.totalorder %s95, %s97
      %p104 = scmp.eq.s32.totalorder %s24, 1
      %p105 = por %p103, %p104
      %p106 = scmp.ne.s32.totalorder %s97, %s98
      %p107 = scmp.eq.s32.totalorder %s24, 0
      %p108 = por %p106, %p107
      %p109 = scmp.ne.s32.totalorder %s97, %s98
      %p110 = scmp.eq.s32.totalorder %s25, 1
      %p111 = por %p109, %p110
      %p113 = scmp.ne.s32.totalorder %s98, %s112
      %p114 = scmp.eq.s32.totalorder %s25, 0
      %p115 = por %p113, %p114
      %s117 = sadd.s32 %s116, 1
      %p120 = scmp.eq.s32.totalorder %s19, 1
      %p121 = scmp.ne.s32.totalorder %s116, %s118
      %p122 = scmp.eq.s32.totalorder %s19, 0
      %p123 = por %p121, %p122
      %p124 = scmp.ne.s32.totalorder %s116, %s118
      %p125 = scmp.eq.s32.totalorder %s24, 1
      %p126 = por %p124, %p125
      %p127 = scmp.ne.s32.totalorder %s118, %s119
      %p128 = scmp.eq.s32.totalorder %s24, 0
      %p129 = por %p127, %p128
      %p130 = scmp.ne.s32.totalorder %s118, %s119
      %p131 = scmp.eq.s32.totalorder %s25, 1
      %p132 = por %p130, %p131
      %p134 = scmp.ne.s32.totalorder %s119, %s133
      %p135 = scmp.eq.s32.totalorder %s25, 0
      %p136 = por %p134, %p135
      %s137 = ssub.s32 %s19, %s26
      %p138 = scmp.eq.s32.totalorder %s137, 0
      %s140 = sadd.s32 %s139, 1
      %s141 = scalar_select %p138, %s139, %s140
      %p144 = pneg %p138
      %p145 = scmp.eq.s32.totalorder %s19, 1
      %p146 = por %p144, %p145
      %p147 = scmp.ne.s32.totalorder %s139, %s142
      %p148 = scmp.eq.s32.totalorder %s19, 0
      %p149 = por %p147, %p148
      %p150 = scmp.ne.s32.totalorder %s139, %s142
      %p151 = scmp.eq.s32.totalorder %s24, 1
      %p152 = por %p150, %p151
      %p153 = scmp.ne.s32.totalorder %s142, %s143
      %p154 = scmp.eq.s32.totalorder %s24, 0
      %p155 = por %p153, %p154
      %p156 = scmp.ne.s32.totalorder %s142, %s143
      %p157 = scmp.eq.s32.totalorder %s25, 1
      %p158 = por %p156, %p157
      %p160 = scmp.ne.s32.totalorder %s143, %s159
      %p161 = scmp.eq.s32.totalorder %s25, 0
      %p162 = por %p160, %p161
      %p163 = scmp.le.s32.totalorder 1, %s19
      %p164 = scmp.lt.s32.totalorder %s19, 3
      %p165 = pnand %p163, %p164
      %p166 = pneg %p165
      // Predicated region
      $region9: #{tpu_custom_call.1} parent=5 // pred_check
        _
      $region10: #{tpu_custom_call.1} parent=5 // pred_check_branch
        %168 = sbr.rel (%p165) target = $region12
      $region11: #{tpu_custom_call.1} parent=5 // pred_region
        %s169 = ssub.s32 %s19, 1
        // Predicated region
        $region13: #{tpu_custom_call.1} parent=11 // pred_check
          %p170 = pneg %p66
        $region14: #{tpu_custom_call.1} parent=11 // pred_check_branch
          %172 = sbr.rel (%p170) target = $region16
        $region15: #{tpu_custom_call.1} parent=11 // pred_region
          %174 = vsyncadd [#allocation6], 0
          %s175 = sshll.u32 %s1, 4
          %s176 = int_to_ptr.hbm [resolvable:$true] %s175
          %s177 = sshll.u32 [#allocation5], 4
          %s178 = int_to_ptr.vmem [resolvable:$true] %s177
          %183 = dma.hbm_to_vmem [thread:$0]  %s176, 1024, %s178, [#allocation6], 64, 64, 4
        $region16: #{tpu_custom_call.1} parent=11 // pred_fallthru
          _
        // Predicated region
        $region17: #{tpu_custom_call.1} parent=11 // pred_check
          %p184 = pneg %p87
        $region18: #{tpu_custom_call.1} parent=11 // pred_check_branch
          %186 = sbr.rel (%p184) target = $region20
        $region19: #{tpu_custom_call.1} parent=11 // pred_region
          %188 = vsyncadd [#allocation6], 0
          %s189 = sshll.u32 %s2, 4
          %s190 = int_to_ptr.hbm [resolvable:$true] %s189
          %s191 = sshll.u32 [#allocation7], 4
          %s192 = int_to_ptr.vmem [resolvable:$true] %s191
          %197 = dma.hbm_to_vmem [thread:$0]  %s190, 1024, %s192, [#allocation6], 64, 64, 4
        $region20: #{tpu_custom_call.1} parent=11 // pred_fallthru
          _
        // Predicated region
        $region21: #{tpu_custom_call.1} parent=11 // pred_check
          %p198 = pneg %p108
        $region22: #{tpu_custom_call.1} parent=11 // pred_check_branch
          %200 = sbr.rel (%p198) target = $region24
        $region23: #{tpu_custom_call.1} parent=11 // pred_region
          %202 = vsyncadd [#allocation9], 0
          %s203 = sshll.u32 %s3, 4
          %s204 = int_to_ptr.hbm [resolvable:$true] %s203
          %s205 = sshll.u32 [#allocation8], 4
          %s206 = int_to_ptr.vmem [resolvable:$true] %s205
          %211 = dma.hbm_to_vmem [thread:$0]  %s204, 1024, %s206, [#allocation9], 64, 64, 4
        $region24: #{tpu_custom_call.1} parent=11 // pred_fallthru
          _
        // Predicated region
        $region25: #{tpu_custom_call.1} parent=11 // pred_check
          %p212 = pneg %p129
        $region26: #{tpu_custom_call.1} parent=11 // pred_check_branch
          %214 = sbr.rel (%p212) target = $region28
        $region27: #{tpu_custom_call.1} parent=11 // pred_region
          %216 = vsyncadd [#allocation9], 0
          %s218 = sshll.u32 %s4, 4
          %s219 = int_to_ptr.hbm [resolvable:$true] %s218
          %s220 = sshll.u32 [#allocation10], 4
          %s221 = int_to_ptr.vmem [resolvable:$true] %s220
          %223 = dma.hbm_to_vmem [thread:$0]  %s219, 64, %s221, [#allocation9]
        $region28: #{tpu_custom_call.1} parent=11 // pred_fallthru
          _
      $region12: #{tpu_custom_call.1} parent=5 // pred_fallthru
        _
      %p224 = scmp.lt.s32.totalorder %s19, 2
      // Predicated region
      $region29: #{tpu_custom_call.1} parent=5 // pred_check
        %p225 = pneg %p224
      $region30: #{tpu_custom_call.1} parent=5 // pred_check_branch
        %227 = sbr.rel (%p225) target = $region32
      $region31: #{tpu_custom_call.1} parent=5 // pred_region
        // Predicated region
        $region33: #{tpu_custom_call.1} parent=31 // pred_check
          %p228 = pneg %p39
        $region34: #{tpu_custom_call.1} parent=31 // pred_check_branch
          %230 = sbr.rel (%p228) target = $region36
        $region35: #{tpu_custom_call.1} parent=31 // pred_region
          %s231 = sand.u32 %s29, 1
          %s232 = scalar_lea.sflag [#allocation3], %s231
          %s233 = sand.u32 %s29, 1
          %s234 = smul.addr %s233, 16
          %s235 = scalar_lea.vmem [#allocation2], %s234
          %s236 = smul.u32 4, %s19
          %238 = vsyncadd %s232, 0
          %s239 = smul.addr %s236, 4
          %s240 = scalar_lea.hbm %s0, %s239
          %s241 = sshll.u32 %s240, 4
          %s242 = int_to_ptr.hbm [resolvable:$true] %s241
          %s243 = sshll.u32 %s235, 4
          %s244 = int_to_ptr.vmem [resolvable:$true] %s243
          %249 = dma.hbm_to_vmem [thread:$0]  %s242, 256, %s244, %s232, 64, 64, 4
        $region36: #{tpu_custom_call.1} parent=31 // pred_fallthru
          _
      $region32: #{tpu_custom_call.1} parent=5 // pred_fallthru
        _
      %p250 = scmp.le.s32.totalorder 1, %s19
      %p251 = scmp.lt.s32.totalorder %s19, 3
      %p252 = pnand %p250, %p251
      %p253 = pneg %p252
      // Predicated region
      $region37: #{tpu_custom_call.1} parent=5 // pred_check
        _
      $region38: #{tpu_custom_call.1} parent=5 // pred_check_branch
        %255 = sbr.rel (%p252) target = $region40
      $region39: #{tpu_custom_call.1} parent=5 // pred_region
        %s256 = ssub.s32 %s19, 1
        %s257 = sand.u32 %s32, 1
        %s258 = scalar_lea.sflag [#allocation3], %s257
        %s259 = sand.u32 %s32, 1
        %s260 = smul.addr %s259, 16
        %s261 = scalar_lea.vmem [#allocation2], %s260
        // Predicated region
        $region41: #{tpu_custom_call.1} parent=39 // pred_check
          %p262 = pneg %p45
        $region42: #{tpu_custom_call.1} parent=39 // pred_check_branch
          %264 = sbr.rel (%p262) target = $region44
        $region43: #{tpu_custom_call.1} parent=39 // pred_region
          %266 = dma.done %s258, 256
        $region44: #{tpu_custom_call.1} parent=39 // pred_fallthru
          _
        // Predicated region
        $region45: #{tpu_custom_call.1} parent=39 // pred_check
          %p267 = pneg %p66
        $region46: #{tpu_custom_call.1} parent=39 // pred_check_branch
          %269 = sbr.rel (%p267) target = $region48
        $region47: #{tpu_custom_call.1} parent=39 // pred_region
          %271 = dma.done [#allocation6], 1024
        $region48: #{tpu_custom_call.1} parent=39 // pred_fallthru
          _
        // Predicated region
        $region49: #{tpu_custom_call.1} parent=39 // pred_check
          %p272 = pneg %p87
        $region50: #{tpu_custom_call.1} parent=39 // pred_check_branch
          %274 = sbr.rel (%p272) target = $region52
        $region51: #{tpu_custom_call.1} parent=39 // pred_region
          %276 = dma.done [#allocation6], 1024
        $region52: #{tpu_custom_call.1} parent=39 // pred_fallthru
          _
        // Predicated region
        $region53: #{tpu_custom_call.1} parent=39 // pred_check
          %p277 = pneg %p108
        $region54: #{tpu_custom_call.1} parent=39 // pred_check_branch
          %279 = sbr.rel (%p277) target = $region56
        $region55: #{tpu_custom_call.1} parent=39 // pred_region
          %281 = dma.done [#allocation9], 1024
        $region56: #{tpu_custom_call.1} parent=39 // pred_fallthru
          _
        // Predicated region
        $region57: #{tpu_custom_call.1} parent=39 // pred_check
          %p282 = pneg %p129
        $region58: #{tpu_custom_call.1} parent=39 // pred_check_branch
          %284 = sbr.rel (%p282) target = $region60
        $region59: #{tpu_custom_call.1} parent=39 // pred_region
          %286 = dma.done [#allocation9], 64
        $region60: #{tpu_custom_call.1} parent=39 // pred_fallthru
          _
        %s287 = sand.u32 %s32, 1
        %s288 = scalar_lea.sflag [#allocation3], %s287
        %s289 = sand.u32 %s32, 1
        %s290 = smul.addr %s289, 16
        %s291 = scalar_lea.vmem [#allocation2], %s290
        %p292 = pneg %p45
        %p293 = pneg %p42
        %p294 = pneg %p66
        %p295 = pneg %p63
        %p296 = pneg %p87
        %p297 = pneg %p84
        %p298 = pneg %p108
        %p299 = pneg %p105
        %p300 = pneg %p129
        %p301 = pneg %p126
        %p302 = pneg %p155
        %p303 = pneg %p152
        %s304 = sand.u32 %s142, 1
        %s305 = scalar_lea.sflag [#allocation4], %s304
        %s306 = sand.u32 %s142, 1
        %s307 = smul.addr %s306, 16
        %s308 = scalar_lea.vmem [#allocation11], %s307
        %s309 = smul.u32 4, %s24
        %s310 = smul.u32 4, %s24
        %v311 = vld [vmem:[%s261] sm:$0xf]
        %v312 = vld [vmem:[%s261 + $0x4] sm:$0xf]
        %v313 = vld [vmem:[%s261 + $0x8] sm:$0xf]
        %v314 = vld [vmem:[%s261 + $0xc] sm:$0xf]
        %v315 = vunpack.c.l.bf16 %v311
        %v316 = vunpack.c.l.bf16 %v312
        %v317 = vunpack.c.l.bf16 %v313
        %v318 = vunpack.c.l.bf16 %v314
        %319 = vadd.xlane.f32.xlu0 %v315
        %v320 = vpop.xlane.xlu0 %319
        %321 = vadd.xlane.f32.xlu0 %v316
        %v322 = vpop.xlane.xlu0 %321
        %323 = vadd.xlane.f32.xlu0 %v317
        %v324 = vpop.xlane.xlu0 %323
        %325 = vadd.xlane.f32.xlu0 %v318
        %v326 = vpop.xlane.xlu0 %325
        %v327 = vrcp.pop 128.0
        %v328 = vmul.f32 128.0, %v327
        %v329 = vsub.f32 1.0, %v328
        %v330 = vmul.f32 %v327, %v329
        %v331 = vadd.f32 %v327, %v330
        %vm332 = vweird.f32 %v327
        %v333 = vsel %vm332, %v327, %v331
        %v334 = vmul.f32 %v320, %v333
        %v335 = vmul.f32 %v322, %v333
        %v336 = vmul.f32 %v324, %v333
        %v337 = vmul.f32 %v326, %v333
        %v338 = vsub.f32 %v315, %v334
        %v339 = vsub.f32 %v316, %v335
        %v340 = vsub.f32 %v317, %v336
        %v341 = vsub.f32 %v318, %v337
        %v342 = vmul.f32 %v338, %v338
        %v343 = vmul.f32 %v339, %v339
        %v344 = vmul.f32 %v340, %v340
        %v345 = vmul.f32 %v341, %v341
        %346 = vadd.xlane.f32.xlu0 %v342
        %v347 = vpop.xlane.xlu0 %346
        %348 = vadd.xlane.f32.xlu0 %v343
        %v349 = vpop.xlane.xlu0 %348
        %350 = vadd.xlane.f32.xlu0 %v344
        %v351 = vpop.xlane.xlu0 %350
        %352 = vadd.xlane.f32.xlu0 %v345
        %v353 = vpop.xlane.xlu0 %352
        %v354 = vmul.f32 %v347, %v333
        %v355 = vmul.f32 %v349, %v333
        %v356 = vmul.f32 %v351, %v333
        %v357 = vmul.f32 %v353, %v333
        %v358 = vadd.f32 %v354, 1e-05
        %v359 = vadd.f32 %v355, 1e-05
        %v360 = vadd.f32 %v356, 1e-05
        %v361 = vadd.f32 %v357, 1e-05
        %v362 = vrsqrt.pop %v358
        %v363 = vmul.f32 %v362, %v358
        %v364 = vmul.f32 %v363, %v362
        %v365 = vmul.f32 0.5, %v364
        %v366 = vsub.f32 1.5, %v365
        %v367 = vmul.f32 %v362, %v366
        %vm368 = vweird.f32 %v358
        %vm369 = vweird.f32 %v362
        %vm370 = vmor %vm368, %vm369
        %v371 = vsel %vm370, %v362, %v367
        %v372 = vrsqrt.pop %v359
        %v373 = vmul.f32 %v372, %v359
        %v374 = vmul.f32 %v373, %v372
        %v375 = vmul.f32 0.5, %v374
        %v376 = vsub.f32 1.5, %v375
        %v377 = vmul.f32 %v372, %v376
        %vm378 = vweird.f32 %v359
        %vm379 = vweird.f32 %v372
        %vm380 = vmor %vm378, %vm379
        %v381 = vsel %vm380, %v372, %v377
        %v382 = vrsqrt.pop %v360
        %v383 = vmul.f32 %v382, %v360
        %v384 = vmul.f32 %v383, %v382
        %v385 = vmul.f32 0.5, %v384
        %v386 = vsub.f32 1.5, %v385
        %v387 = vmul.f32 %v382, %v386
        %vm388 = vweird.f32 %v360
        %vm389 = vweird.f32 %v382
        %vm390 = vmor %vm388, %vm389
        %v391 = vsel %vm390, %v382, %v387
        %v392 = vrsqrt.pop %v361
        %v393 = vmul.f32 %v392, %v361
        %v394 = vmul.f32 %v393, %v392
        %v395 = vmul.f32 0.5, %v394
        %v396 = vsub.f32 1.5, %v395
        %v397 = vmul.f32 %v392, %v396
        %vm398 = vweird.f32 %v361
        %vm399 = vweird.f32 %v392
        %vm400 = vmor %vm398, %vm399
        %v401 = vsel %vm400, %v392, %v397
        %v402 = vmul.f32 %v338, %v371
        %v403 = vmul.f32 %v339, %v381
        %v404 = vmul.f32 %v340, %v391
        %v405 = vmul.f32 %v341, %v401
        %v406 = vld [vmem:[#allocation5] sm:$0xf]
        %v407 = vld [vmem:[#allocation5 + $0x4] sm:$0xf]
        %v408 = vld [vmem:[#allocation5 + $0x8] sm:$0xf]
        %v409 = vld [vmem:[#allocation5 + $0xc] sm:$0xf]
        %v410 = vld [vmem:[#allocation5 + $0x10] sm:$0xf]
        %v411 = vld [vmem:[#allocation5 + $0x14] sm:$0xf]
        %v412 = vld [vmem:[#allocation5 + $0x18] sm:$0xf]
        %v413 = vld [vmem:[#allocation5 + $0x1c] sm:$0xf]
        %v414 = vld [vmem:[#allocation5 + $0x20] sm:$0xf]
        %v415 = vld [vmem:[#allocation5 + $0x24] sm:$0xf]
        %v416 = vld [vmem:[#allocation5 + $0x28] sm:$0xf]
        %v417 = vld [vmem:[#allocation5 + $0x2c] sm:$0xf]
        %v418 = vld [vmem:[#allocation5 + $0x30] sm:$0xf]
        %v419 = vld [vmem:[#allocation5 + $0x34] sm:$0xf]
        %v420 = vld [vmem:[#allocation5 + $0x38] sm:$0xf]
        %v421 = vld [vmem:[#allocation5 + $0x3c] sm:$0xf]
        %v422 = vld [vmem:[#allocation10] sm:$0x1]
        %v423 = vpack.c.bf16 %v403, %v402
        %v424 = vpack.c.bf16 %v405, %v404
        %v425 = vperm.slane %v422, 0
        %v442 = vunpack.c.l.b16 %v406
        %v443 = vunpack.c.l.b16 %v407
        %v444 = vunpack.c.l.b16 %v408
        %v445 = vunpack.c.l.b16 %v409
        %v446 = vunpack.c.l.b16 %v410
        %v447 = vunpack.c.l.b16 %v411
        %v448 = vunpack.c.l.b16 %v412
        %v449 = vunpack.c.l.b16 %v413
        %v450 = vunpack.c.l.b16 %v414
        %v451 = vunpack.c.l.b16 %v415
        %v452 = vunpack.c.l.b16 %v416
        %v453 = vunpack.c.l.b16 %v417
        %v454 = vunpack.c.l.b16 %v418
        %v455 = vunpack.c.l.b16 %v419
        %v456 = vunpack.c.l.b16 %v420
        %v457 = vunpack.c.l.b16 %v421
        %v458 = vpack.c.b16 %v443, %v442
        %v459 = vpack.c.b16 %v445, %v444
        %v460 = vpack.c.b16 %v447, %v446
        %v461 = vpack.c.b16 %v449, %v448
        %v462 = vpack.c.b16 %v451, %v450
        %v463 = vpack.c.b16 %v453, %v452
        %v464 = vpack.c.b16 %v455, %v454
        %v465 = vpack.c.b16 %v457, %v456
        %474 = vmatpush.bf16.msra.mxu0 %v465
        %475 = vmatpush.bf16.msra.mxu0 %v464
        %476 = vmatpush.bf16.msra.mxu0 %v463
        %477 = vmatpush.bf16.msra.mxu0 %v462
        %478 = vmatpush.bf16.msra.mxu0 %v461
        %479 = vmatpush.bf16.msra.mxu0 %v460
        %480 = vmatpush.bf16.msra.mxu0 %v459
        %481 = vmatpush.bf16.msra.mxu0 %v458
        %482 = vmatmul.bf16.gmra.mxu0 %v423
        %v483 = vpop.f32.mrf.mxu0
        %v484 = vadd.f32 %v425, %v483
        %v485 = vpop.f32.mrf.mxu0
        %v486 = vadd.f32 %v425, %v485
        %487 = vmatmul.bf16.gmra.mxu0 %v424
        %v488 = vpop.f32.mrf.mxu0
        %v489 = vadd.f32 %v425, %v488
        %v490 = vpop.f32.mrf.mxu0
        %v491 = vadd.f32 %v425, %v490
        %492 = vdwg.mxu0
        %v493 = vmax.f32 %v484, 0.0
        %v494 = vmax.f32 %v486, 0.0
        %v495 = vmax.f32 %v489, 0.0
        %v496 = vmax.f32 %v491, 0.0
        %497 = vadd.xlane.f32.xlu0 %v493
        %v498 = vpop.xlane.xlu0 %497
        %499 = vadd.xlane.f32.xlu0 %v494
        %v500 = vpop.xlane.xlu0 %499
        %501 = vadd.xlane.f32.xlu0 %v495
        %v502 = vpop.xlane.xlu0 %501
        %503 = vadd.xlane.f32.xlu0 %v496
        %v504 = vpop.xlane.xlu0 %503
        %v505 = vmul.f32 %v498, %v333
        %v506 = vmul.f32 %v500, %v333
        %v507 = vmul.f32 %v502, %v333
        %v508 = vmul.f32 %v504, %v333
        %v509 = vsub.f32 %v493, %v505
        %v510 = vsub.f32 %v494, %v506
        %v511 = vsub.f32 %v495, %v507
        %v512 = vsub.f32 %v496, %v508
        %v513 = vmul.f32 %v509, %v509
        %v514 = vmul.f32 %v510, %v510
        %v515 = vmul.f32 %v511, %v511
        %v516 = vmul.f32 %v512, %v512
        %517 = vadd.xlane.f32.xlu0 %v513
        %v518 = vpop.xlane.xlu0 %517
        %519 = vadd.xlane.f32.xlu0 %v514
        %v520 = vpop.xlane.xlu0 %519
        %521 = vadd.xlane.f32.xlu0 %v515
        %v522 = vpop.xlane.xlu0 %521
        %523 = vadd.xlane.f32.xlu0 %v516
        %v524 = vpop.xlane.xlu0 %523
        %v525 = vmul.f32 %v518, %v333
        %v526 = vmul.f32 %v520, %v333
        %v527 = vmul.f32 %v522, %v333
        %v528 = vmul.f32 %v524, %v333
        %v529 = vadd.f32 %v525, 1e-05
        %v530 = vadd.f32 %v526, 1e-05
        %v531 = vadd.f32 %v527, 1e-05
        %v532 = vadd.f32 %v528, 1e-05
        %v533 = vrsqrt.pop %v529
        %v534 = vmul.f32 %v533, %v529
        %v535 = vmul.f32 %v534, %v533
        %v536 = vmul.f32 0.5, %v535
        %v537 = vsub.f32 1.5, %v536
        %v538 = vmul.f32 %v533, %v537
        %vm539 = vweird.f32 %v529
        %vm540 = vweird.f32 %v533
        %vm541 = vmor %vm539, %vm540
        %v542 = vsel %vm541, %v533, %v538
        %v543 = vrsqrt.pop %v530
        %v544 = vmul.f32 %v543, %v530
        %v545 = vmul.f32 %v544, %v543
        %v546 = vmul.f32 0.5, %v545
        %v547 = vsub.f32 1.5, %v546
        %v548 = vmul.f32 %v543, %v547
        %vm549 = vweird.f32 %v530
        %vm550 = vweird.f32 %v543
        %vm551 = vmor %vm549, %vm550
        %v552 = vsel %vm551, %v543, %v548
        %v553 = vrsqrt.pop %v531
        %v554 = vmul.f32 %v553, %v531
        %v555 = vmul.f32 %v554, %v553
        %v556 = vmul.f32 0.5, %v555
        %v557 = vsub.f32 1.5, %v556
        %v558 = vmul.f32 %v553, %v557
        %vm559 = vweird.f32 %v531
        %vm560 = vweird.f32 %v553
        %vm561 = vmor %vm559, %vm560
        %v562 = vsel %vm561, %v553, %v558
        %v563 = vrsqrt.pop %v532
        %v564 = vmul.f32 %v563, %v532
        %v565 = vmul.f32 %v564, %v563
        %v566 = vmul.f32 0.5, %v565
        %v567 = vsub.f32 1.5, %v566
        %v568 = vmul.f32 %v563, %v567
        %vm569 = vweird.f32 %v532
        %vm570 = vweird.f32 %v563
        %vm571 = vmor %vm569, %vm570
        %v572 = vsel %vm571, %v563, %v568
        %v573 = vmul.f32 %v509, %v542
        %v574 = vmul.f32 %v510, %v552
        %v575 = vmul.f32 %v511, %v562
        %v576 = vmul.f32 %v512, %v572
        %v577 = vld [vmem:[#allocation7] sm:$0xf]
        %v578 = vld [vmem:[#allocation7 + $0x4] sm:$0xf]
        %v579 = vld [vmem:[#allocation7 + $0x8] sm:$0xf]
        %v580 = vld [vmem:[#allocation7 + $0xc] sm:$0xf]
        %v581 = vld [vmem:[#allocation7 + $0x10] sm:$0xf]
        %v582 = vld [vmem:[#allocation7 + $0x14] sm:$0xf]
        %v583 = vld [vmem:[#allocation7 + $0x18] sm:$0xf]
        %v584 = vld [vmem:[#allocation7 + $0x1c] sm:$0xf]
        %v585 = vld [vmem:[#allocation7 + $0x20] sm:$0xf]
        %v586 = vld [vmem:[#allocation7 + $0x24] sm:$0xf]
        %v587 = vld [vmem:[#allocation7 + $0x28] sm:$0xf]
        %v588 = vld [vmem:[#allocation7 + $0x2c] sm:$0xf]
        %v589 = vld [vmem:[#allocation7 + $0x30] sm:$0xf]
        %v590 = vld [vmem:[#allocation7 + $0x34] sm:$0xf]
        %v591 = vld [vmem:[#allocation7 + $0x38] sm:$0xf]
        %v592 = vld [vmem:[#allocation7 + $0x3c] sm:$0xf]
        %v593 = vld [vmem:[#allocation10 + $0x1] sm:$0x1]
        %v594 = vpack.c.bf16 %v574, %v573
        %v595 = vpack.c.bf16 %v576, %v575
        %v596 = vperm.slane %v593, 0
        %v613 = vunpack.c.l.b16 %v577
        %v614 = vunpack.c.l.b16 %v578
        %v615 = vunpack.c.l.b16 %v579
        %v616 = vunpack.c.l.b16 %v580
        %v617 = vunpack.c.l.b16 %v581
        %v618 = vunpack.c.l.b16 %v582
        %v619 = vunpack.c.l.b16 %v583
        %v620 = vunpack.c.l.b16 %v584
        %v621 = vunpack.c.l.b16 %v585
        %v622 = vunpack.c.l.b16 %v586
        %v623 = vunpack.c.l.b16 %v587
        %v624 = vunpack.c.l.b16 %v588
        %v625 = vunpack.c.l.b16 %v589
        %v626 = vunpack.c.l.b16 %v590
        %v627 = vunpack.c.l.b16 %v591
        %v628 = vunpack.c.l.b16 %v592
        %v629 = vpack.c.b16 %v614, %v613
        %v630 = vpack.c.b16 %v616, %v615
        %v631 = vpack.c.b16 %v618, %v617
        %v632 = vpack.c.b16 %v620, %v619
        %v633 = vpack.c.b16 %v622, %v621
        %v634 = vpack.c.b16 %v624, %v623
        %v635 = vpack.c.b16 %v626, %v625
        %v636 = vpack.c.b16 %v628, %v627
        %645 = vmatpush.bf16.msra.mxu0 %v636
        %646 = vmatpush.bf16.msra.mxu0 %v635
        %647 = vmatpush.bf16.msra.mxu0 %v634
        %648 = vmatpush.bf16.msra.mxu0 %v633
        %649 = vmatpush.bf16.msra.mxu0 %v632
        %650 = vmatpush.bf16.msra.mxu0 %v631
        %651 = vmatpush.bf16.msra.mxu0 %v630
        %652 = vmatpush.bf16.msra.mxu0 %v629
        %653 = vmatmul.bf16.gmra.mxu0 %v594
        %v654 = vpop.f32.mrf.mxu0
        %v655 = vadd.f32 %v596, %v654
        %v656 = vpop.f32.mrf.mxu0
        %v657 = vadd.f32 %v596, %v656
        %658 = vmatmul.bf16.gmra.mxu0 %v595
        %v659 = vpop.f32.mrf.mxu0
        %v660 = vadd.f32 %v596, %v659
        %v661 = vpop.f32.mrf.mxu0
        %v662 = vadd.f32 %v596, %v661
        %663 = vdwg.mxu0
        %v664 = vmax.f32 %v655, 0.0
        %v665 = vmax.f32 %v657, 0.0
        %v666 = vmax.f32 %v660, 0.0
        %v667 = vmax.f32 %v662, 0.0
        %v668 = vld [vmem:[#allocation8] sm:$0xf]
        %v669 = vld [vmem:[#allocation8 + $0x4] sm:$0xf]
        %v670 = vld [vmem:[#allocation8 + $0x8] sm:$0xf]
        %v671 = vld [vmem:[#allocation8 + $0xc] sm:$0xf]
        %v672 = vld [vmem:[#allocation8 + $0x10] sm:$0xf]
        %v673 = vld [vmem:[#allocation8 + $0x14] sm:$0xf]
        %v674 = vld [vmem:[#allocation8 + $0x18] sm:$0xf]
        %v675 = vld [vmem:[#allocation8 + $0x1c] sm:$0xf]
        %v676 = vld [vmem:[#allocation8 + $0x20] sm:$0xf]
        %v677 = vld [vmem:[#allocation8 + $0x24] sm:$0xf]
        %v678 = vld [vmem:[#allocation8 + $0x28] sm:$0xf]
        %v679 = vld [vmem:[#allocation8 + $0x2c] sm:$0xf]
        %v680 = vld [vmem:[#allocation8 + $0x30] sm:$0xf]
        %v681 = vld [vmem:[#allocation8 + $0x34] sm:$0xf]
        %v682 = vld [vmem:[#allocation8 + $0x38] sm:$0xf]
        %v683 = vld [vmem:[#allocation8 + $0x3c] sm:$0xf]
        %v684 = vld [vmem:[#allocation10 + $0x2] sm:$0x1]
        %v685 = vpack.c.bf16 %v665, %v664
        %v686 = vpack.c.bf16 %v667, %v666
        %v687 = vperm.slane %v684, 0
        %v704 = vunpack.c.l.b16 %v668
        %v705 = vunpack.c.l.b16 %v669
        %v706 = vunpack.c.l.b16 %v670
        %v707 = vunpack.c.l.b16 %v671
        %v708 = vunpack.c.l.b16 %v672
        %v709 = vunpack.c.l.b16 %v673
        %v710 = vunpack.c.l.b16 %v674
        %v711 = vunpack.c.l.b16 %v675
        %v712 = vunpack.c.l.b16 %v676
        %v713 = vunpack.c.l.b16 %v677
        %v714 = vunpack.c.l.b16 %v678
        %v715 = vunpack.c.l.b16 %v679
        %v716 = vunpack.c.l.b16 %v680
        %v717 = vunpack.c.l.b16 %v681
        %v718 = vunpack.c.l.b16 %v682
        %v719 = vunpack.c.l.b16 %v683
        %v720 = vpack.c.b16 %v705, %v704
        %v721 = vpack.c.b16 %v707, %v706
        %v722 = vpack.c.b16 %v709, %v708
        %v723 = vpack.c.b16 %v711, %v710
        %v724 = vpack.c.b16 %v713, %v712
        %v725 = vpack.c.b16 %v715, %v714
        %v726 = vpack.c.b16 %v717, %v716
        %v727 = vpack.c.b16 %v719, %v718
        %736 = vmatpush.bf16.msra.mxu0 %v727
        %737 = vmatpush.bf16.msra.mxu0 %v726
        %738 = vmatpush.bf16.msra.mxu0 %v725
        %739 = vmatpush.bf16.msra.mxu0 %v724
        %740 = vmatpush.bf16.msra.mxu0 %v723
        %741 = vmatpush.bf16.msra.mxu0 %v722
        %742 = vmatpush.bf16.msra.mxu0 %v721
        %743 = vmatpush.bf16.msra.mxu0 %v720
        %744 = vmatmul.bf16.gmra.mxu0 %v685
        %v745 = vpop.f32.mrf.mxu0
        %v746 = vadd.f32 %v687, %v745
        %v747 = vpop.f32.mrf.mxu0
        %v748 = vadd.f32 %v687, %v747
        %749 = vmatmul.bf16.gmra.mxu0 %v686
        %v750 = vpop.f32.mrf.mxu0
        %v751 = vadd.f32 %v687, %v750
        %v752 = vpop.f32.mrf.mxu0
        %v753 = vadd.f32 %v687, %v752
        %754 = vdwg.mxu0
        %v755 = vpack.c.bf16 %v746, %v746
        %v756 = vpack.c.bf16 %v748, %v748
        %v757 = vpack.c.bf16 %v751, %v751
        %v758 = vpack.c.bf16 %v753, %v753
        %759 = vst [vmem:[%s308] sm:$0xf] %v755
        %760 = vst [vmem:[%s308 + $0x4] sm:$0xf] %v756
        %761 = vst [vmem:[%s308 + $0x8] sm:$0xf] %v757
        %762 = vst [vmem:[%s308 + $0xc] sm:$0xf] %v758
        %s763 = sand.u32 %s142, 1
        %s764 = scalar_lea.sflag [#allocation4], %s763
        %s765 = sand.u32 %s142, 1
        %s766 = smul.addr %s765, 16
        %s767 = scalar_lea.vmem [#allocation11], %s766
        // Predicated region
        $region61: #{tpu_custom_call.1} parent=39 // pred_check
          %p768 = pneg %p152
        $region62: #{tpu_custom_call.1} parent=39 // pred_check_branch
          %770 = sbr.rel (%p768) target = $region64
        $region63: #{tpu_custom_call.1} parent=39 // pred_region
          %s771 = smul.u32 4, %s24
          %773 = vsyncadd %s764, 0
          %s774 = smul.addr %s771, 4
          %s775 = scalar_lea.hbm %s5, %s774
          %s776 = sshll.u32 %s767, 4
          %s777 = int_to_ptr.vmem [resolvable:$true] %s776
          %s778 = sshll.u32 %s775, 4
          %s779 = int_to_ptr.hbm [resolvable:$true] %s778
          %784 = dma.vmem_to_hbm [thread:$0]  %s777, 256, %s779, %s764, 64, 64, 4
        $region64: #{tpu_custom_call.1} parent=39 // pred_fallthru
          _
      $region40: #{tpu_custom_call.1} parent=5 // pred_fallthru
        _
      %p785 = scmp.le.s32.totalorder 2, %s19
      // Predicated region
      $region65: #{tpu_custom_call.1} parent=5 // pred_check
        %p786 = pneg %p785
      $region66: #{tpu_custom_call.1} parent=5 // pred_check_branch
        %788 = sbr.rel (%p786) target = $region68
      $region67: #{tpu_custom_call.1} parent=5 // pred_region
        %s789 = ssub.s32 %s19, 2
        // Predicated region
        $region69: #{tpu_custom_call.1} parent=67 // pred_check
          %p790 = pneg %p158
        $region70: #{tpu_custom_call.1} parent=67 // pred_check_branch
          %792 = sbr.rel (%p790) target = $region72
        $region71: #{tpu_custom_call.1} parent=67 // pred_region
          %s793 = sand.u32 %s143, 1
          %s794 = scalar_lea.sflag [#allocation4], %s793
          %s795 = sand.u32 %s143, 1
          %s796 = smul.addr %s795, 16
          %s797 = scalar_lea.vmem [#allocation11], %s796
          %799 = dma.done %s794, 256
        $region72: #{tpu_custom_call.1} parent=67 // pred_fallthru
          _
      $region68: #{tpu_custom_call.1} parent=5 // pred_fallthru
        _
    $region6: #{tpu_custom_call.1} parent=1 // loop_footer
      %s23 = sadd.s32 1, %s19
    $region7: #{tpu_custom_call.1} parent=1 // loop_footer_branch
      %18 = sbr.rel target = $region3
    $region8: #{tpu_custom_call.1} parent=1 // loop_exit
      _
    %800 = vsyncpa [#allocation3], 1
    %s801 = scalar_lea.sflag [#allocation3], 1
    %802 = vsyncpa %s801, 1
    %803 = vsyncpa [#allocation6], 1
    %804 = vsyncpa [#allocation9], 1
    %805 = vsyncpa [#allocation4], 1
    %s806 = scalar_lea.sflag [#allocation4], 1
    %807 = vsyncpa %s806, 1

</llo_original>
